<compile_context>
chip_gen: v6e
topology: v6e:2x2x1
jax: 0.10.0
libtpu: 0.0.40
codegen_flags: <defaults>
</compile_context>

<pallas_src>
import math
from functools import partial

import jax
import jax.numpy as jnp
from jax.experimental import pallas as pl
from jax.experimental.pallas import tpu as pltpu


def _layernorm(x, gamma, beta, eps=1e-5):
    mean = jnp.mean(x, axis=-1, keepdims=True)
    var = jnp.mean((x - mean) ** 2, axis=-1, keepdims=True)
    return (x - mean) * jax.lax.rsqrt(var + eps) * gamma + beta


def _mask_bias(n, local_context):
    # union of 'strided' and 'local' masks from parrallel_recomb with
    # q_t = kv_t = [1..n]  ->  diff = i - j ; additive bias (0 keep / -1e30 drop)
    ii = jnp.arange(n, dtype=jnp.int32)[:, None]
    jj = jnp.arange(n, dtype=jnp.int32)[None, :]
    d = ii - jj
    local = (d >= 0) & (d <= local_context)
    strided = (d >= 0) & (d % local_context == 0)
    keep = local | strided
    return jnp.where(keep, 0.0, -1e30).astype(jnp.float32)


def _sparse_block_kernel(
    mask_ref, xf_ref, xq_ref,
    wq_ref, wk_ref, wv_ref, wu3_ref, bu_ref,
    ln1_g_ref, ln1_b_ref, wf1_ref, bf1_ref, wf2_ref, bf2_ref,
    ln2_g_ref, ln2_b_ref,
    o_ref,
    k_scratch, v_scratch,
    *, heads, hidden,
):
    f32 = jnp.float32
    bf16 = jnp.bfloat16

    # ---- K / V projections: once per sequence (first q-tile of each batch) ---
    @pl.when(pl.program_id(1) == 0)
    def _():
        xf = xf_ref[0]                                                # (N, E) bf16
        k = jnp.dot(xf, wk_ref[...], preferred_element_type=f32)     # (N, H*hd) f32
        v = jnp.dot(xf, wv_ref[...], preferred_element_type=f32)
        for h in range(heads):
            sl = slice(h * hidden, (h + 1) * hidden)
            k_scratch[h] = k[:, sl].astype(bf16)                      # (N, hd)
            v_scratch[h] = v[:, sl].astype(bf16)

    # ---- Q projection for this query tile (scale applied once: 1/hidden) -----
    xq = xq_ref[0]                                                    # (TQ, E) f32
    q = jnp.dot(xq.astype(bf16), wq_ref[...], preferred_element_type=f32)
    q = q * f32(1.0 / hidden)                                         # (q/√h)·(k/√h)
    qh = jnp.stack(
        [q[:, h * hidden:(h + 1) * hidden] for h in range(heads)], axis=0
    ).astype(bf16)                                                    # (H, TQ, hd)

    # ---- batched attention scores over all heads ------------------------------
    s = jnp.einsum("hqd,hkd->hqk", qh, k_scratch[...],
                   preferred_element_type=f32)                        # (H, TQ, N)
    s = s + mask_ref[...][None, :, :]                                 # sparse bias

    m = jnp.max(s, axis=-1, keepdims=True)
    p = jnp.exp(s - m)
    p = p * pl.reciprocal(jnp.sum(p, axis=-1, keepdims=True), approx=True)

    out = jnp.einsum("hqk,hkd->hqd", p.astype(bf16), v_scratch[...],
                     preferred_element_type=f32)                      # (H, TQ, hd)

    # ---- unify heads: sum_h out_h @ Wu_h  (no concatenate / relayout) --------
    attended = bu_ref[...].astype(f32)                                # (1, E) bcast
    for h in range(heads):
        attended = attended + jnp.dot(out[h].astype(bf16), wu3_ref[h],
                                      preferred_element_type=f32)

    # ---- residual + LayerNorm 1 -----------------------------------------------
    x1 = _layernorm(attended + xq, ln1_g_ref[...], ln1_b_ref[...])

    # ---- feed forward (Linear -> ReLU -> Linear) ------------------------------
    h1 = jnp.dot(x1.astype(bf16), wf1_ref[...], preferred_element_type=f32)
    h1 = jnp.maximum(h1 + bf1_ref[...], 0.0)
    ff = jnp.dot(h1.astype(bf16), wf2_ref[...], preferred_element_type=f32)
    ff = ff + bf2_ref[...]

    # ---- residual + LayerNorm 2 -----------------------------------------------
    x2 = _layernorm(ff + x1, ln2_g_ref[...], ln2_b_ref[...])

    # dropout layers are identity (p = 0.0 / eval semantics)
    o_ref[0] = x2.astype(o_ref.dtype)


def sparse_block_pallas(x, params, *, heads, hidden, local_context=3, tq=None):
    B, N, E = x.shape
    HH = heads * hidden
    F = params["wf1"].shape[1]

    if tq is None:
        tq = next(t for t in (256, 128, 64, 32, 16, 8, N) if N % t == 0)
    assert N % tq == 0 and (tq == N or tq % 8 == 0)
    nq = N // tq

    bf16 = jnp.bfloat16
    mask_bias = _mask_bias(N, local_context)
    x_bf = x.astype(bf16)
    x_f32 = x.astype(jnp.float32)

    wq = params["wq"].astype(bf16)
    wk = params["wk"].astype(bf16)
    wv = params["wv"].astype(bf16)
    wu3 = params["wu"].astype(bf16).reshape(heads, hidden, E)   # (H, hd, E)
    wf1 = params["wf1"].astype(bf16)
    wf2 = params["wf2"].astype(bf16)
    bu, ln1_g, ln1_b, bf1, bf2, ln2_g, ln2_b = (
        params[k].astype(jnp.float32)
        for k in ("bu", "ln1_g", "ln1_b", "bf1", "bf2", "ln2_g", "ln2_b"))

    weights = (wq, wk, wv, wu3, bu, ln1_g, ln1_b, wf1, bf1, wf2, bf2, ln2_g, ln2_b)

    def const_spec(arr):
        nd = arr.ndim
        return pl.BlockSpec(arr.shape, lambda b, q, _nd=nd: (0,) * _nd)

    in_specs = [
        pl.BlockSpec((tq, N), lambda b, q: (q, 0)),          # additive mask bias
        pl.BlockSpec((1, N, E), lambda b, q: (b, 0, 0)),      # full sequence (bf16)
        pl.BlockSpec((1, tq, E), lambda b, q: (b, q, 0)),     # query tile (f32)
    ] + [const_spec(w) for w in weights]

    flops = B * (
        3 * 2 * N * E * HH            # q/k/v projections
        + 4 * heads * N * N * hidden  # scores + p@v
        + 2 * N * HH * E              # unify heads
        + 4 * N * E * F               # feed forward (two matmuls)
    )
    bytes_accessed = (
        x_bf.size * 2 + x_f32.size * 4 + B * N * E * 4 + mask_bias.size * 4
        + sum(int(w.size) * w.dtype.itemsize for w in weights)
    )
    cost = pl.CostEstimate(flops=int(flops),
                           transcendentals=int(B * heads * N * N),
                           bytes_accessed=int(bytes_accessed))

    kernel = partial(_sparse_block_kernel, heads=heads, hidden=hidden)

    return pl.pallas_call(
        kernel,
        out_shape=jax.ShapeDtypeStruct((B, N, E), jnp.float32),
        grid=(B, nq),
        in_specs=in_specs,
        out_specs=pl.BlockSpec((1, tq, E), lambda b, q: (b, q, 0)),
        scratch_shapes=[pltpu.VMEM((heads, N, hidden), bf16),   # K per head
                        pltpu.VMEM((heads, N, hidden), bf16)],  # V per head
        compiler_params=pltpu.CompilerParams(
            dimension_semantics=("parallel", "arbitrary")),
        cost_estimate=cost,
    )(mask_bias, x_bf, x_f32, *weights)


# ------------------------- pure-JAX f32 reference ----------------------------
def sparse_block_ref(x, p, *, heads, hidden, local_context=3):
    B, N, E = x.shape

    def split_heads(t):  # (B,N,H*hd) -> (B,H,N,hd)
        return t.reshape(B, N, heads, hidden).transpose(0, 2, 1, 3)

    q = split_heads(x @ p["wq"]) / math.sqrt(hidden)
    k = split_heads(x @ p["wk"]) / math.sqrt(hidden)
    v = split_heads(x @ p["wv"])
    dot = jnp.einsum("bhqd,bhkd->bhqk", q, k)
    keep = _mask_bias(N, local_context) == 0.0
    dot = jnp.where(keep, dot, -jnp.inf)
    att = jax.nn.softmax(dot, axis=-1)
    out = jnp.einsum("bhqk,bhkd->bhqd", att, v)
    out = out.transpose(0, 2, 1, 3).reshape(B, N, heads * hidden)
    attended = out @ p["wu"] + p["bu"][0]
    x1 = _layernorm(attended + x, p["ln1_g"][0], p["ln1_b"][0])
    ff = jnp.maximum(x1 @ p["wf1"] + p["bf1"][0], 0.0) @ p["wf2"] + p["bf2"][0]
    return _layernorm(ff + x1, p["ln2_g"][0], p["ln2_b"][0])


# ------------------------------- main -----------------------------------------
def make_params(key, emb, hidden, heads, ff_hidden_mult):
    hh = heads * hidden
    F = ff_hidden_mult * emb
    ks = jax.random.split(key, 12)
    s = 0.1
    return {
        "wq": s * jax.random.normal(ks[0], (emb, hh), jnp.float32),
        "wk": s * jax.random.normal(ks[1], (emb, hh), jnp.float32),
        "wv": s * jax.random.normal(ks[2], (emb, hh), jnp.float32),
        "wu": s * jax.random.normal(ks[3], (hh, emb), jnp.float32),
        "bu": s * jax.random.normal(ks[4], (1, emb), jnp.float32),
        "ln1_g": 1.0 + 0.1 * jax.random.normal(ks[5], (1, emb), jnp.float32),
        "ln1_b": 0.1 * jax.random.normal(ks[6], (1, emb), jnp.float32),
        "wf1": s * jax.random.normal(ks[7], (emb, F), jnp.float32),
        "bf1": s * jax.random.normal(ks[8], (1, F), jnp.float32),
        "wf2": s * jax.random.normal(ks[9], (F, emb), jnp.float32),
        "bf2": s * jax.random.normal(ks[10], (1, emb), jnp.float32),
        "ln2_g": 1.0 + 0.1 * jax.random.normal(ks[11], (1, emb), jnp.float32),
        "ln2_b": jnp.zeros((1, emb), jnp.float32),
    }


if __name__ == "__main__":
    B, N, E = 2, 16, 32
    HEADS, HIDDEN, FF_MULT, LOCAL = 4, 16, 4, 3
    TQ = 8   # two query tiles per sequence -> exercises the tiled grid path

    key = jax.random.PRNGKey(0)
    kx, kp = jax.random.split(key)
    x = jax.random.normal(kx, (B, N, E), jnp.float32)
    params = make_params(kp, E, HIDDEN, HEADS, FF_MULT)

    out = sparse_block_pallas(x, params, heads=HEADS, hidden=HIDDEN,
                              local_context=LOCAL, tq=TQ)
    out = jax.block_until_ready(out)

    ref = sparse_block_ref(x, params, heads=HEADS, hidden=HIDDEN,
                           local_context=LOCAL)
    assert out.shape == (B, N, E)
    err = float(jnp.max(jnp.abs(out - ref)))
    # bf16 matmul operands -> relaxed tolerance vs the pure-f32 reference
    assert jnp.allclose(out, ref, atol=3e-2, rtol=3e-2), f"mismatch (max abs err {err})"

    print("KERNEL_OK")
</pallas_src>

<mosaic_0001>
module attributes {stable_mosaic.version = 11 : i64} {
  func.func @_sparse_block_kernel(%arg0: i32, %arg1: i32, %arg2: memref<8x16xf32, #tpu.memory_space<vmem>>, %arg3: memref<1x16x32xbf16, #tpu.memory_space<vmem>>, %arg4: memref<1x8x32xf32, #tpu.memory_space<vmem>>, %arg5: memref<32x64xbf16, #tpu.memory_space<vmem>>, %arg6: memref<32x64xbf16, #tpu.memory_space<vmem>>, %arg7: memref<32x64xbf16, #tpu.memory_space<vmem>>, %arg8: memref<4x16x32xbf16, #tpu.memory_space<vmem>>, %arg9: memref<1x32xf32, #tpu.memory_space<vmem>>, %arg10: memref<1x32xf32, #tpu.memory_space<vmem>>, %arg11: memref<1x32xf32, #tpu.memory_space<vmem>>, %arg12: memref<32x128xbf16, #tpu.memory_space<vmem>>, %arg13: memref<1x128xf32, #tpu.memory_space<vmem>>, %arg14: memref<128x32xbf16, #tpu.memory_space<vmem>>, %arg15: memref<1x32xf32, #tpu.memory_space<vmem>>, %arg16: memref<1x32xf32, #tpu.memory_space<vmem>>, %arg17: memref<1x32xf32, #tpu.memory_space<vmem>>, %arg18: memref<1x8x32xf32, #tpu.memory_space<vmem>>, %arg19: memref<4x16x16xbf16, #tpu.memory_space<vmem>>, %arg20: memref<4x16x16xbf16, #tpu.memory_space<vmem>>) attributes {dimension_semantics = [#tpu.dimension_semantics<parallel>, #tpu.dimension_semantics<arbitrary>], iteration_bounds = array<i64: 2, 2>, scalar_prefetch = 0 : i64, scratch_operands = 2 : i64, tpu.core_type = #tpu.core_type<tc>, window_params = [{transform_indices = @transform_0, window_bounds = array<i64: 8, 16>}, {transform_indices = @transform_1, window_bounds = array<i64: 1, 16, 32>}, {transform_indices = @transform_2, window_bounds = array<i64: 1, 8, 32>}, {pipeline_mode = #tpu.pipeline_mode<synchronous>, transform_indices = @transform_3, window_bounds = array<i64: 32, 64>}, {pipeline_mode = #tpu.pipeline_mode<synchronous>, transform_indices = @transform_4, window_bounds = array<i64: 32, 64>}, {pipeline_mode = #tpu.pipeline_mode<synchronous>, transform_indices = @transform_5, window_bounds = array<i64: 32, 64>}, {pipeline_mode = #tpu.pipeline_mode<synchronous>, transform_indices = @transform_6, window_bounds = array<i64: 4, 16, 32>}, {pipeline_mode = #tpu.pipeline_mode<synchronous>, transform_indices = @transform_7, window_bounds = array<i64: 1, 32>}, {pipeline_mode = #tpu.pipeline_mode<synchronous>, transform_indices = @transform_8, window_bounds = array<i64: 1, 32>}, {pipeline_mode = #tpu.pipeline_mode<synchronous>, transform_indices = @transform_9, window_bounds = array<i64: 1, 32>}, {pipeline_mode = #tpu.pipeline_mode<synchronous>, transform_indices = @transform_10, window_bounds = array<i64: 32, 128>}, {pipeline_mode = #tpu.pipeline_mode<synchronous>, transform_indices = @transform_11, window_bounds = array<i64: 1, 128>}, {pipeline_mode = #tpu.pipeline_mode<synchronous>, transform_indices = @transform_12, window_bounds = array<i64: 128, 32>}, {pipeline_mode = #tpu.pipeline_mode<synchronous>, transform_indices = @transform_13, window_bounds = array<i64: 1, 32>}, {pipeline_mode = #tpu.pipeline_mode<synchronous>, transform_indices = @transform_14, window_bounds = array<i64: 1, 32>}, {pipeline_mode = #tpu.pipeline_mode<synchronous>, transform_indices = @transform_15, window_bounds = array<i64: 1, 32>}, {transform_indices = @transform_16, window_bounds = array<i64: 1, 8, 32>}]} {
    %c0_i32 = arith.constant 0 : i32
    %0 = arith.cmpi eq, %arg1, %c0_i32 : i32
    %1 = arith.extui %0 : i1 to i32
    %c0_i32_0 = arith.constant 0 : i32
    %2 = arith.cmpi ne, %1, %c0_i32_0 : i32
    scf.if %2 {
      %c0_65 = arith.constant 0 : index
      %c0_66 = arith.constant 0 : index
      %c0_67 = arith.constant 0 : index
      %136 = vector.load %arg3[%c0_65, %c0_66, %c0_67] : memref<1x16x32xbf16, #tpu.memory_space<vmem>>, vector<1x16x32xbf16>
      %137 = vector.shape_cast %136 : vector<1x16x32xbf16> to vector<16x32xbf16>
      %c0_68 = arith.constant 0 : index
      %c0_69 = arith.constant 0 : index
      %138 = vector.load %arg6[%c0_68, %c0_69] : memref<32x64xbf16, #tpu.memory_space<vmem>>, vector<32x64xbf16>
      %cst_70 = arith.constant dense<0.000000e+00> : vector<16x64xf32>
      %139 = tpu.matmul %137, %138, %cst_70 {dimension_numbers = #tpu.dot_dimension_numbers<[1], [0], [0], [1], [0, 0, 1, 1], [], []>} : vector<16x32xbf16>, vector<32x64xbf16>, vector<16x64xf32> -> vector<16x64xf32>
      %c0_71 = arith.constant 0 : index
      %c0_72 = arith.constant 0 : index
      %140 = vector.load %arg7[%c0_71, %c0_72] : memref<32x64xbf16, #tpu.memory_space<vmem>>, vector<32x64xbf16>
      %cst_73 = arith.constant dense<0.000000e+00> : vector<16x64xf32>
      %141 = tpu.matmul %137, %140, %cst_73 {dimension_numbers = #tpu.dot_dimension_numbers<[1], [0], [0], [1], [0, 0, 1, 1], [], []>} : vector<16x32xbf16>, vector<32x64xbf16>, vector<16x64xf32> -> vector<16x64xf32>
      %142 = vector.extract_strided_slice %139 {offsets = [0, 0], sizes = [16, 16], strides = [1, 1]} : vector<16x64xf32> to vector<16x16xf32>
      %143 = arith.truncf %142 : vector<16x16xf32> to vector<16x16xbf16>
      %c0_74 = arith.constant 0 : index
      %c0_75 = arith.constant 0 : index
      %c0_76 = arith.constant 0 : index
      %144 = vector.load %arg19[%c0_74, %c0_75, %c0_76] : memref<4x16x16xbf16, #tpu.memory_space<vmem>>, vector<1x16x16xbf16>
      %145 = vector.shape_cast %144 : vector<1x16x16xbf16> to vector<16x16xbf16>
      %146 = vector.shape_cast %143 : vector<16x16xbf16> to vector<1x16x16xbf16>
      tpu.vector_store %arg19[%c0_74, %c0_75, %c0_76], %146 {strides = array<i32>} : memref<4x16x16xbf16, #tpu.memory_space<vmem>>, vector<1x16x16xbf16>,
      %147 = vector.extract_strided_slice %141 {offsets = [0, 0], sizes = [16, 16], strides = [1, 1]} : vector<16x64xf32> to vector<16x16xf32>
      %148 = arith.truncf %147 : vector<16x16xf32> to vector<16x16xbf16>
      %c0_77 = arith.constant 0 : index
      %c0_78 = arith.constant 0 : index
      %c0_79 = arith.constant 0 : index
      %149 = vector.load %arg20[%c0_77, %c0_78, %c0_79] : memref<4x16x16xbf16, #tpu.memory_space<vmem>>, vector<1x16x16xbf16>
      %150 = vector.shape_cast %149 : vector<1x16x16xbf16> to vector<16x16xbf16>
      %151 = vector.shape_cast %148 : vector<16x16xbf16> to vector<1x16x16xbf16>
      tpu.vector_store %arg20[%c0_77, %c0_78, %c0_79], %151 {strides = array<i32>} : memref<4x16x16xbf16, #tpu.memory_space<vmem>>, vector<1x16x16xbf16>,
      %152 = vector.extract_strided_slice %139 {offsets = [0, 16], sizes = [16, 16], strides = [1, 1]} : vector<16x64xf32> to vector<16x16xf32>
      %153 = arith.truncf %152 : vector<16x16xf32> to vector<16x16xbf16>
      %c1_80 = arith.constant 1 : index
      %c0_81 = arith.constant 0 : index
      %c0_82 = arith.constant 0 : index
      %154 = vector.load %arg19[%c1_80, %c0_81, %c0_82] : memref<4x16x16xbf16, #tpu.memory_space<vmem>>, vector<1x16x16xbf16>
      %155 = vector.shape_cast %154 : vector<1x16x16xbf16> to vector<16x16xbf16>
      %156 = vector.shape_cast %153 : vector<16x16xbf16> to vector<1x16x16xbf16>
      tpu.vector_store %arg19[%c1_80, %c0_81, %c0_82], %156 {strides = array<i32>} : memref<4x16x16xbf16, #tpu.memory_space<vmem>>, vector<1x16x16xbf16>,
      %157 = vector.extract_strided_slice %141 {offsets = [0, 16], sizes = [16, 16], strides = [1, 1]} : vector<16x64xf32> to vector<16x16xf32>
      %158 = arith.truncf %157 : vector<16x16xf32> to vector<16x16xbf16>
      %c1_83 = arith.constant 1 : index
      %c0_84 = arith.constant 0 : index
      %c0_85 = arith.constant 0 : index
      %159 = vector.load %arg20[%c1_83, %c0_84, %c0_85] : memref<4x16x16xbf16, #tpu.memory_space<vmem>>, vector<1x16x16xbf16>
      %160 = vector.shape_cast %159 : vector<1x16x16xbf16> to vector<16x16xbf16>
      %161 = vector.shape_cast %158 : vector<16x16xbf16> to vector<1x16x16xbf16>
      tpu.vector_store %arg20[%c1_83, %c0_84, %c0_85], %161 {strides = array<i32>} : memref<4x16x16xbf16, #tpu.memory_space<vmem>>, vector<1x16x16xbf16>,
      %162 = vector.extract_strided_slice %139 {offsets = [0, 32], sizes = [16, 16], strides = [1, 1]} : vector<16x64xf32> to vector<16x16xf32>
      %163 = arith.truncf %162 : vector<16x16xf32> to vector<16x16xbf16>
      %c2_86 = arith.constant 2 : index
      %c0_87 = arith.constant 0 : index
      %c0_88 = arith.constant 0 : index
      %164 = vector.load %arg19[%c2_86, %c0_87, %c0_88] : memref<4x16x16xbf16, #tpu.memory_space<vmem>>, vector<1x16x16xbf16>
      %165 = vector.shape_cast %164 : vector<1x16x16xbf16> to vector<16x16xbf16>
      %166 = vector.shape_cast %163 : vector<16x16xbf16> to vector<1x16x16xbf16>
      tpu.vector_store %arg19[%c2_86, %c0_87, %c0_88], %166 {strides = array<i32>} : memref<4x16x16xbf16, #tpu.memory_space<vmem>>, vector<1x16x16xbf16>,
      %167 = vector.extract_strided_slice %141 {offsets = [0, 32], sizes = [16, 16], strides = [1, 1]} : vector<16x64xf32> to vector<16x16xf32>
      %168 = arith.truncf %167 : vector<16x16xf32> to vector<16x16xbf16>
      %c2_89 = arith.constant 2 : index
      %c0_90 = arith.constant 0 : index
      %c0_91 = arith.constant 0 : index
      %169 = vector.load %arg20[%c2_89, %c0_90, %c0_91] : memref<4x16x16xbf16, #tpu.memory_space<vmem>>, vector<1x16x16xbf16>
      %170 = vector.shape_cast %169 : vector<1x16x16xbf16> to vector<16x16xbf16>
      %171 = vector.shape_cast %168 : vector<16x16xbf16> to vector<1x16x16xbf16>
      tpu.vector_store %arg20[%c2_89, %c0_90, %c0_91], %171 {strides = array<i32>} : memref<4x16x16xbf16, #tpu.memory_space<vmem>>, vector<1x16x16xbf16>,
      %172 = vector.extract_strided_slice %139 {offsets = [0, 48], sizes = [16, 16], strides = [1, 1]} : vector<16x64xf32> to vector<16x16xf32>
      %173 = arith.truncf %172 : vector<16x16xf32> to vector<16x16xbf16>
      %c3_92 = arith.constant 3 : index
      %c0_93 = arith.constant 0 : index
      %c0_94 = arith.constant 0 : index
      %174 = vector.load %arg19[%c3_92, %c0_93, %c0_94] : memref<4x16x16xbf16, #tpu.memory_space<vmem>>, vector<1x16x16xbf16>
      %175 = vector.shape_cast %174 : vector<1x16x16xbf16> to vector<16x16xbf16>
      %176 = vector.shape_cast %173 : vector<16x16xbf16> to vector<1x16x16xbf16>
      tpu.vector_store %arg19[%c3_92, %c0_93, %c0_94], %176 {strides = array<i32>} : memref<4x16x16xbf16, #tpu.memory_space<vmem>>, vector<1x16x16xbf16>,
      %177 = vector.extract_strided_slice %141 {offsets = [0, 48], sizes = [16, 16], strides = [1, 1]} : vector<16x64xf32> to vector<16x16xf32>
      %178 = arith.truncf %177 : vector<16x16xf32> to vector<16x16xbf16>
      %c3_95 = arith.constant 3 : index
      %c0_96 = arith.constant 0 : index
      %c0_97 = arith.constant 0 : index
      %179 = vector.load %arg20[%c3_95, %c0_96, %c0_97] : memref<4x16x16xbf16, #tpu.memory_space<vmem>>, vector<1x16x16xbf16>
      %180 = vector.shape_cast %179 : vector<1x16x16xbf16> to vector<16x16xbf16>
      %181 = vector.shape_cast %178 : vector<16x16xbf16> to vector<1x16x16xbf16>
      tpu.vector_store %arg20[%c3_95, %c0_96, %c0_97], %181 {strides = array<i32>} : memref<4x16x16xbf16, #tpu.memory_space<vmem>>, vector<1x16x16xbf16>,
    } else {
    }
    %c0 = arith.constant 0 : index
    %c0_1 = arith.constant 0 : index
    %c0_2 = arith.constant 0 : index
    %3 = vector.load %arg4[%c0, %c0_1, %c0_2] : memref<1x8x32xf32, #tpu.memory_space<vmem>>, vector<1x8x32xf32>
    %4 = vector.shape_cast %3 : vector<1x8x32xf32> to vector<8x32xf32>
    %5 = arith.truncf %4 : vector<8x32xf32> to vector<8x32xbf16>
    %c0_3 = arith.constant 0 : index
    %c0_4 = arith.constant 0 : index
    %6 = vector.load %arg5[%c0_3, %c0_4] : memref<32x64xbf16, #tpu.memory_space<vmem>>, vector<32x64xbf16>
    %cst = arith.constant dense<0.000000e+00> : vector<8x64xf32>
    %7 = tpu.matmul %5, %6, %cst {dimension_numbers = #tpu.dot_dimension_numbers<[1], [0], [0], [1], [0, 0, 1, 1], [], []>} : vector<8x32xbf16>, vector<32x64xbf16>, vector<8x64xf32> -> vector<8x64xf32>
    %cst_5 = arith.constant 6.250000e-02 : f32
    %8 = vector.broadcast %cst_5 : f32 to vector<8x64xf32>
    %9 = arith.mulf %7, %8 : vector<8x64xf32>
    %10 = vector.extract_strided_slice %9 {offsets = [0, 0], sizes = [8, 16], strides = [1, 1]} : vector<8x64xf32> to vector<8x16xf32>
    %11 = vector.extract_strided_slice %9 {offsets = [0, 16], sizes = [8, 16], strides = [1, 1]} : vector<8x64xf32> to vector<8x16xf32>
    %12 = vector.extract_strided_slice %9 {offsets = [0, 32], sizes = [8, 16], strides = [1, 1]} : vector<8x64xf32> to vector<8x16xf32>
    %13 = vector.extract_strided_slice %9 {offsets = [0, 48], sizes = [8, 16], strides = [1, 1]} : vector<8x64xf32> to vector<8x16xf32>
    %14 = vector.shape_cast %10 : vector<8x16xf32> to vector<1x8x16xf32>
    %15 = vector.shape_cast %11 : vector<8x16xf32> to vector<1x8x16xf32>
    %16 = vector.shape_cast %12 : vector<8x16xf32> to vector<1x8x16xf32>
    %17 = vector.shape_cast %13 : vector<8x16xf32> to vector<1x8x16xf32>
    %18 = tpu.concatenate %14, %15, %16, %17 in 0 : vector<1x8x16xf32>, vector<1x8x16xf32>, vector<1x8x16xf32>, vector<1x8x16xf32> -> vector<4x8x16xf32>
    %19 = arith.truncf %18 : vector<4x8x16xf32> to vector<4x8x16xbf16>
    %c0_6 = arith.constant 0 : index
    %c0_7 = arith.constant 0 : index
    %c0_8 = arith.constant 0 : index
    %20 = vector.load %arg19[%c0_6, %c0_7, %c0_8] : memref<4x16x16xbf16, #tpu.memory_space<vmem>>, vector<4x16x16xbf16>
    "tpu.trace_start"() <{level = 10 : i32, message = "hqd,hkd->hqk"}> : () -> ()
    %cst_9 = arith.constant dense<0.000000e+00> : vector<4x8x16xf32>
    %21 = tpu.matmul %19, %20, %cst_9 {dimension_numbers = #tpu.dot_dimension_numbers<[2], [2], [1], [1], [0, 0, 0, 1, 1, 1], [0], [0]>} : vector<4x8x16xbf16>, vector<4x16x16xbf16>, vector<4x8x16xf32> -> vector<4x8x16xf32>
    "tpu.trace_stop"() : () -> ()
    %c0_10 = arith.constant 0 : index
    %c0_11 = arith.constant 0 : index
    %22 = vector.load %arg2[%c0_10, %c0_11] : memref<8x16xf32, #tpu.memory_space<vmem>>, vector<8x16xf32>
    %23 = vector.shape_cast %22 : vector<8x16xf32> to vector<1x8x16xf32>
    %24 = vector.broadcast %23 : vector<1x8x16xf32> to vector<4x8x16xf32>
    %25 = arith.addf %21, %24 : vector<4x8x16xf32>
    %cst_12 = arith.constant dense<0xFF800000> : vector<4x8xf32>
    %26 = vector.multi_reduction <maximumf>, %25, %cst_12 [2] : vector<4x8x16xf32> to vector<4x8xf32>
    %27 = vector.shape_cast %26 : vector<4x8xf32> to vector<4x8x1xf32>
    %28 = vector.broadcast %27 : vector<4x8x1xf32> to vector<4x8x16xf32>
    %29 = arith.subf %25, %28 : vector<4x8x16xf32>
    %30 = math.exp %29 : vector<4x8x16xf32>
    %cst_13 = arith.constant dense<0.000000e+00> : vector<4x8xf32>
    %31 = vector.multi_reduction <add>, %30, %cst_13 [2] : vector<4x8x16xf32> to vector<4x8xf32>
    %32 = vector.shape_cast %31 : vector<4x8xf32> to vector<4x8x1xf32>
    %33 = tpu.reciprocal %32 {approx = true} : vector<4x8x1xf32> -> vector<4x8x1xf32>
    %34 = vector.broadcast %33 : vector<4x8x1xf32> to vector<4x8x16xf32>
    %35 = arith.mulf %30, %34 : vector<4x8x16xf32>
    %36 = arith.truncf %35 : vector<4x8x16xf32> to vector<4x8x16xbf16>
    %c0_14 = arith.constant 0 : index
    %c0_15 = arith.constant 0 : index
    %c0_16 = arith.constant 0 : index
    %37 = vector.load %arg20[%c0_14, %c0_15, %c0_16] : memref<4x16x16xbf16, #tpu.memory_space<vmem>>, vector<4x16x16xbf16>
    "tpu.trace_start"() <{level = 10 : i32, message = "hqk,hkd->hqd"}> : () -> ()
    %cst_17 = arith.constant dense<0.000000e+00> : vector<4x8x16xf32>
    %38 = tpu.matmul %36, %37, %cst_17 {dimension_numbers = #tpu.dot_dimension_numbers<[2], [1], [1], [2], [0, 0, 0, 1, 1, 2], [0], [0]>} : vector<4x8x16xbf16>, vector<4x16x16xbf16>, vector<4x8x16xf32> -> vector<4x8x16xf32>
    "tpu.trace_stop"() : () -> ()
    %c0_18 = arith.constant 0 : index
    %c0_19 = arith.constant 0 : index
    %39 = vector.load %arg9[%c0_18, %c0_19] : memref<1x32xf32, #tpu.memory_space<vmem>>, vector<1x32xf32>
    %40 = vector.extract_strided_slice %38 {offsets = [0, 0, 0], sizes = [1, 8, 16], strides = [1, 1, 1]} : vector<4x8x16xf32> to vector<1x8x16xf32>
    %41 = vector.shape_cast %40 : vector<1x8x16xf32> to vector<8x16xf32>
    %42 = arith.truncf %41 : vector<8x16xf32> to vector<8x16xbf16>
    %c0_20 = arith.constant 0 : index
    %c0_21 = arith.constant 0 : index
    %c0_22 = arith.constant 0 : index
    %43 = vector.load %arg8[%c0_20, %c0_21, %c0_22] : memref<4x16x32xbf16, #tpu.memory_space<vmem>>, vector<1x16x32xbf16>
    %44 = vector.shape_cast %43 : vector<1x16x32xbf16> to vector<16x32xbf16>
    %cst_23 = arith.constant dense<0.000000e+00> : vector<8x32xf32>
    %45 = tpu.matmul %42, %44, %cst_23 {dimension_numbers = #tpu.dot_dimension_numbers<[1], [0], [0], [1], [0, 0, 1, 1], [], []>} : vector<8x16xbf16>, vector<16x32xbf16>, vector<8x32xf32> -> vector<8x32xf32>
    %46 = vector.broadcast %39 : vector<1x32xf32> to vector<8x32xf32>
    %47 = arith.addf %46, %45 : vector<8x32xf32>
    %48 = vector.extract_strided_slice %38 {offsets = [1, 0, 0], sizes = [1, 8, 16], strides = [1, 1, 1]} : vector<4x8x16xf32> to vector<1x8x16xf32>
    %49 = vector.shape_cast %48 : vector<1x8x16xf32> to vector<8x16xf32>
    %50 = arith.truncf %49 : vector<8x16xf32> to vector<8x16xbf16>
    %c1 = arith.constant 1 : index
    %c0_24 = arith.constant 0 : index
    %c0_25 = arith.constant 0 : index
    %51 = vector.load %arg8[%c1, %c0_24, %c0_25] : memref<4x16x32xbf16, #tpu.memory_space<vmem>>, vector<1x16x32xbf16>
    %52 = vector.shape_cast %51 : vector<1x16x32xbf16> to vector<16x32xbf16>
    %cst_26 = arith.constant dense<0.000000e+00> : vector<8x32xf32>
    %53 = tpu.matmul %50, %52, %cst_26 {dimension_numbers = #tpu.dot_dimension_numbers<[1], [0], [0], [1], [0, 0, 1, 1], [], []>} : vector<8x16xbf16>, vector<16x32xbf16>, vector<8x32xf32> -> vector<8x32xf32>
    %54 = arith.addf %47, %53 : vector<8x32xf32>
    %55 = vector.extract_strided_slice %38 {offsets = [2, 0, 0], sizes = [1, 8, 16], strides = [1, 1, 1]} : vector<4x8x16xf32> to vector<1x8x16xf32>
    %56 = vector.shape_cast %55 : vector<1x8x16xf32> to vector<8x16xf32>
    %57 = arith.truncf %56 : vector<8x16xf32> to vector<8x16xbf16>
    %c2 = arith.constant 2 : index
    %c0_27 = arith.constant 0 : index
    %c0_28 = arith.constant 0 : index
    %58 = vector.load %arg8[%c2, %c0_27, %c0_28] : memref<4x16x32xbf16, #tpu.memory_space<vmem>>, vector<1x16x32xbf16>
    %59 = vector.shape_cast %58 : vector<1x16x32xbf16> to vector<16x32xbf16>
    %cst_29 = arith.constant dense<0.000000e+00> : vector<8x32xf32>
    %60 = tpu.matmul %57, %59, %cst_29 {dimension_numbers = #tpu.dot_dimension_numbers<[1], [0], [0], [1], [0, 0, 1, 1], [], []>} : vector<8x16xbf16>, vector<16x32xbf16>, vector<8x32xf32> -> vector<8x32xf32>
    %61 = arith.addf %54, %60 : vector<8x32xf32>
    %62 = vector.extract_strided_slice %38 {offsets = [3, 0, 0], sizes = [1, 8, 16], strides = [1, 1, 1]} : vector<4x8x16xf32> to vector<1x8x16xf32>
    %63 = vector.shape_cast %62 : vector<1x8x16xf32> to vector<8x16xf32>
    %64 = arith.truncf %63 : vector<8x16xf32> to vector<8x16xbf16>
    %c3 = arith.constant 3 : index
    %c0_30 = arith.constant 0 : index
    %c0_31 = arith.constant 0 : index
    %65 = vector.load %arg8[%c3, %c0_30, %c0_31] : memref<4x16x32xbf16, #tpu.memory_space<vmem>>, vector<1x16x32xbf16>
    %66 = vector.shape_cast %65 : vector<1x16x32xbf16> to vector<16x32xbf16>
    %cst_32 = arith.constant dense<0.000000e+00> : vector<8x32xf32>
    %67 = tpu.matmul %64, %66, %cst_32 {dimension_numbers = #tpu.dot_dimension_numbers<[1], [0], [0], [1], [0, 0, 1, 1], [], []>} : vector<8x16xbf16>, vector<16x32xbf16>, vector<8x32xf32> -> vector<8x32xf32>
    %68 = arith.addf %61, %67 : vector<8x32xf32>
    %69 = arith.addf %68, %4 : vector<8x32xf32>
    %c0_33 = arith.constant 0 : index
    %c0_34 = arith.constant 0 : index
    %70 = vector.load %arg10[%c0_33, %c0_34] : memref<1x32xf32, #tpu.memory_space<vmem>>, vector<1x32xf32>
    %c0_35 = arith.constant 0 : index
    %c0_36 = arith.constant 0 : index
    %71 = vector.load %arg11[%c0_35, %c0_36] : memref<1x32xf32, #tpu.memory_space<vmem>>, vector<1x32xf32>
    %cst_37 = arith.constant dense<0.000000e+00> : vector<8xf32>
    %72 = vector.multi_reduction <add>, %69, %cst_37 [1] : vector<8x32xf32> to vector<8xf32>
    %73 = vector.shape_cast %72 : vector<8xf32> to vector<8x1xf32>
    %cst_38 = arith.constant 3.200000e+01 : f32
    %74 = vector.broadcast %cst_38 : f32 to vector<8x1xf32>
    %75 = arith.divf %73, %74 : vector<8x1xf32>
    %76 = vector.broadcast %75 : vector<8x1xf32> to vector<8x32xf32>
    %77 = arith.subf %69, %76 : vector<8x32xf32>
    %78 = arith.mulf %77, %77 : vector<8x32xf32>
    %cst_39 = arith.constant dense<0.000000e+00> : vector<8xf32>
    %79 = vector.multi_reduction <add>, %78, %cst_39 [1] : vector<8x32xf32> to vector<8xf32>
    %80 = vector.shape_cast %79 : vector<8xf32> to vector<8x1xf32>
    %cst_40 = arith.constant 3.200000e+01 : f32
    %81 = vector.broadcast %cst_40 : f32 to vector<8x1xf32>
    %82 = arith.divf %80, %81 : vector<8x1xf32>
    %83 = vector.broadcast %75 : vector<8x1xf32> to vector<8x32xf32>
    %84 = arith.subf %69, %83 : vector<8x32xf32>
    %cst_41 = arith.constant 9.99999974E-6 : f32
    %85 = vector.broadcast %cst_41 : f32 to vector<8x1xf32>
    %86 = arith.addf %82, %85 : vector<8x1xf32>
    %87 = math.rsqrt %86 : vector<8x1xf32>
    %88 = vector.broadcast %87 : vector<8x1xf32> to vector<8x32xf32>
    %89 = arith.mulf %84, %88 : vector<8x32xf32>
    %90 = vector.broadcast %70 : vector<1x32xf32> to vector<8x32xf32>
    %91 = arith.mulf %89, %90 : vector<8x32xf32>
    %92 = vector.broadcast %71 : vector<1x32xf32> to vector<8x32xf32>
    %93 = arith.addf %91, %92 : vector<8x32xf32>
    %94 = arith.truncf %93 : vector<8x32xf32> to vector<8x32xbf16>
    %c0_42 = arith.constant 0 : index
    %c0_43 = arith.constant 0 : index
    %95 = vector.load %arg12[%c0_42, %c0_43] : memref<32x128xbf16, #tpu.memory_space<vmem>>, vector<32x128xbf16>
    %cst_44 = arith.constant dense<0.000000e+00> : vector<8x128xf32>
    %96 = tpu.matmul %94, %95, %cst_44 {dimension_numbers = #tpu.dot_dimension_numbers<[1], [0], [0], [1], [0, 0, 1, 1], [], []>} : vector<8x32xbf16>, vector<32x128xbf16>, vector<8x128xf32> -> vector<8x128xf32>
    %c0_45 = arith.constant 0 : index
    %c0_46 = arith.constant 0 : index
    %97 = vector.load %arg13[%c0_45, %c0_46] : memref<1x128xf32, #tpu.memory_space<vmem>>, vector<1x128xf32>
    %98 = vector.broadcast %97 : vector<1x128xf32> to vector<8x128xf32>
    %99 = arith.addf %96, %98 : vector<8x128xf32>
    %cst_47 = arith.constant 0.000000e+00 : f32
    %100 = vector.broadcast %cst_47 : f32 to vector<8x128xf32>
    %101 = arith.maximumf %99, %100 : vector<8x128xf32>
    %102 = arith.truncf %101 : vector<8x128xf32> to vector<8x128xbf16>
    %c0_48 = arith.constant 0 : index
    %c0_49 = arith.constant 0 : index
    %103 = vector.load %arg14[%c0_48, %c0_49] : memref<128x32xbf16, #tpu.memory_space<vmem>>, vector<128x32xbf16>
    %cst_50 = arith.constant dense<0.000000e+00> : vector<8x32xf32>
    %104 = tpu.matmul %102, %103, %cst_50 {dimension_numbers = #tpu.dot_dimension_numbers<[1], [0], [0], [1], [0, 0, 1, 1], [], []>} : vector<8x128xbf16>, vector<128x32xbf16>, vector<8x32xf32> -> vector<8x32xf32>
    %c0_51 = arith.constant 0 : index
    %c0_52 = arith.constant 0 : index
    %105 = vector.load %arg15[%c0_51, %c0_52] : memref<1x32xf32, #tpu.memory_space<vmem>>, vector<1x32xf32>
    %106 = vector.broadcast %105 : vector<1x32xf32> to vector<8x32xf32>
    %107 = arith.addf %104, %106 : vector<8x32xf32>
    %108 = arith.addf %107, %93 : vector<8x32xf32>
    %c0_53 = arith.constant 0 : index
    %c0_54 = arith.constant 0 : index
    %109 = vector.load %arg16[%c0_53, %c0_54] : memref<1x32xf32, #tpu.memory_space<vmem>>, vector<1x32xf32>
    %c0_55 = arith.constant 0 : index
    %c0_56 = arith.constant 0 : index
    %110 = vector.load %arg17[%c0_55, %c0_56] : memref<1x32xf32, #tpu.memory_space<vmem>>, vector<1x32xf32>
    %cst_57 = arith.constant dense<0.000000e+00> : vector<8xf32>
    %111 = vector.multi_reduction <add>, %108, %cst_57 [1] : vector<8x32xf32> to vector<8xf32>
    %112 = vector.shape_cast %111 : vector<8xf32> to vector<8x1xf32>
    %cst_58 = arith.constant 3.200000e+01 : f32
    %113 = vector.broadcast %cst_58 : f32 to vector<8x1xf32>
    %114 = arith.divf %112, %113 : vector<8x1xf32>
    %115 = vector.broadcast %114 : vector<8x1xf32> to vector<8x32xf32>
    %116 = arith.subf %108, %115 : vector<8x32xf32>
    %117 = arith.mulf %116, %116 : vector<8x32xf32>
    %cst_59 = arith.constant dense<0.000000e+00> : vector<8xf32>
    %118 = vector.multi_reduction <add>, %117, %cst_59 [1] : vector<8x32xf32> to vector<8xf32>
    %119 = vector.shape_cast %118 : vector<8xf32> to vector<8x1xf32>
    %cst_60 = arith.constant 3.200000e+01 : f32
    %120 = vector.broadcast %cst_60 : f32 to vector<8x1xf32>
    %121 = arith.divf %119, %120 : vector<8x1xf32>
    %122 = vector.broadcast %114 : vector<8x1xf32> to vector<8x32xf32>
    %123 = arith.subf %108, %122 : vector<8x32xf32>
    %cst_61 = arith.constant 9.99999974E-6 : f32
    %124 = vector.broadcast %cst_61 : f32 to vector<8x1xf32>
    %125 = arith.addf %121, %124 : vector<8x1xf32>
    %126 = math.rsqrt %125 : vector<8x1xf32>
    %127 = vector.broadcast %126 : vector<8x1xf32> to vector<8x32xf32>
    %128 = arith.mulf %123, %127 : vector<8x32xf32>
    %129 = vector.broadcast %109 : vector<1x32xf32> to vector<8x32xf32>
    %130 = arith.mulf %128, %129 : vector<8x32xf32>
    %131 = vector.broadcast %110 : vector<1x32xf32> to vector<8x32xf32>
    %132 = arith.addf %130, %131 : vector<8x32xf32>
    %c0_62 = arith.constant 0 : index
    %c0_63 = arith.constant 0 : index
    %c0_64 = arith.constant 0 : index
    %133 = vector.load %arg18[%c0_62, %c0_63, %c0_64] : memref<1x8x32xf32, #tpu.memory_space<vmem>>, vector<1x8x32xf32>
    %134 = vector.shape_cast %133 : vector<1x8x32xf32> to vector<8x32xf32>
    %135 = vector.shape_cast %132 : vector<8x32xf32> to vector<1x8x32xf32>
    tpu.vector_store %arg18[%c0_62, %c0_63, %c0_64], %135 {strides = array<i32>} : memref<1x8x32xf32, #tpu.memory_space<vmem>>, vector<1x8x32xf32>,
    return
  }
  func.func @transform_0(%arg0: i32, %arg1: i32) -> (i32, i32) {
    %c0_i32 = arith.constant 0 : i32
    %c0_i32_0 = arith.constant 0 : i32
    return %arg1, %c0_i32 : i32, i32
  }
  func.func @transform_1(%arg0: i32, %arg1: i32) -> (i32, i32, i32) {
    %c0_i32 = arith.constant 0 : i32
    %c0_i32_0 = arith.constant 0 : i32
    %c0_i32_1 = arith.constant 0 : i32
    return %arg0, %c0_i32, %c0_i32_0 : i32, i32, i32
  }
  func.func @transform_2(%arg0: i32, %arg1: i32) -> (i32, i32, i32) {
    %c0_i32 = arith.constant 0 : i32
    %c0_i32_0 = arith.constant 0 : i32
    return %arg0, %arg1, %c0_i32 : i32, i32, i32
  }
  func.func @transform_3(%arg0: i32, %arg1: i32) -> (i32, i32) {
    %c0_i32 = arith.constant 0 : i32
    %c0_i32_0 = arith.constant 0 : i32
    %c0_i32_1 = arith.constant 0 : i32
    return %c0_i32, %c0_i32_0 : i32, i32
  }
  func.func @transform_4(%arg0: i32, %arg1: i32) -> (i32, i32) {
    %c0_i32 = arith.constant 0 : i32
    %c0_i32_0 = arith.constant 0 : i32
    %c0_i32_1 = arith.constant 0 : i32
    return %c0_i32, %c0_i32_0 : i32, i32
  }
  func.func @transform_5(%arg0: i32, %arg1: i32) -> (i32, i32) {
    %c0_i32 = arith.constant 0 : i32
    %c0_i32_0 = arith.constant 0 : i32
    %c0_i32_1 = arith.constant 0 : i32
    return %c0_i32, %c0_i32_0 : i32, i32
  }
  func.func @transform_6(%arg0: i32, %arg1: i32) -> (i32, i32, i32) {
    %c0_i32 = arith.constant 0 : i32
    %c0_i32_0 = arith.constant 0 : i32
    %c0_i32_1 = arith.constant 0 : i32
    %c0_i32_2 = arith.constant 0 : i32
    return %c0_i32, %c0_i32_0, %c0_i32_1 : i32, i32, i32
  }
  func.func @transform_7(%arg0: i32, %arg1: i32) -> (i32, i32) {
    %c0_i32 = arith.constant 0 : i32
    %c0_i32_0 = arith.constant 0 : i32
    %c0_i32_1 = arith.constant 0 : i32
    return %c0_i32, %c0_i32_0 : i32, i32
  }
  func.func @transform_8(%arg0: i32, %arg1: i32) -> (i32, i32) {
    %c0_i32 = arith.constant 0 : i32
    %c0_i32_0 = arith.constant 0 : i32
    %c0_i32_1 = arith.constant 0 : i32
    return %c0_i32, %c0_i32_0 : i32, i32
  }
  func.func @transform_9(%arg0: i32, %arg1: i32) -> (i32, i32) {
    %c0_i32 = arith.constant 0 : i32
    %c0_i32_0 = arith.constant 0 : i32
    %c0_i32_1 = arith.constant 0 : i32
    return %c0_i32, %c0_i32_0 : i32, i32
  }
  func.func @transform_10(%arg0: i32, %arg1: i32) -> (i32, i32) {
    %c0_i32 = arith.constant 0 : i32
    %c0_i32_0 = arith.constant 0 : i32
    %c0_i32_1 = arith.constant 0 : i32
    return %c0_i32, %c0_i32_0 : i32, i32
  }
  func.func @transform_11(%arg0: i32, %arg1: i32) -> (i32, i32) {
    %c0_i32 = arith.constant 0 : i32
    %c0_i32_0 = arith.constant 0 : i32
    %c0_i32_1 = arith.constant 0 : i32
    return %c0_i32, %c0_i32_0 : i32, i32
  }
  func.func @transform_12(%arg0: i32, %arg1: i32) -> (i32, i32) {
    %c0_i32 = arith.constant 0 : i32
    %c0_i32_0 = arith.constant 0 : i32
    %c0_i32_1 = arith.constant 0 : i32
    return %c0_i32, %c0_i32_0 : i32, i32
  }
  func.func @transform_13(%arg0: i32, %arg1: i32) -> (i32, i32) {
    %c0_i32 = arith.constant 0 : i32
    %c0_i32_0 = arith.constant 0 : i32
    %c0_i32_1 = arith.constant 0 : i32
    return %c0_i32, %c0_i32_0 : i32, i32
  }
  func.func @transform_14(%arg0: i32, %arg1: i32) -> (i32, i32) {
    %c0_i32 = arith.constant 0 : i32
    %c0_i32_0 = arith.constant 0 : i32
    %c0_i32_1 = arith.constant 0 : i32
    return %c0_i32, %c0_i32_0 : i32, i32
  }
  func.func @transform_15(%arg0: i32, %arg1: i32) -> (i32, i32) {
    %c0_i32 = arith.constant 0 : i32
    %c0_i32_0 = arith.constant 0 : i32
    %c0_i32_1 = arith.constant 0 : i32
    return %c0_i32, %c0_i32_0 : i32, i32
  }
  func.func @transform_16(%arg0: i32, %arg1: i32) -> (i32, i32, i32) {
    %c0_i32 = arith.constant 0 : i32
    %c0_i32_0 = arith.constant 0 : i32
    return %arg0, %arg1, %c0_i32 : i32, i32, i32
  }
}

</mosaic_0001>

<llo_original>
// kernel: tpu_custom_call.1
$region0: #{tpu_custom_call.1}
  #allocation0 [shape = 'u32[]', space=smem, size = 0x4, offset = 0x4, fixed_abs, tag = 'smem constant byte address 0x4 - core index']
  #allocation1 [shape = 'u32[144,128]{1,0:T(1,128)}', space=vmem, size = 0x12000, scoped, tag = 'internal scratch']
  #allocation2 [shape = 'bf16[4,16,16]{2,1,0:T(8,128)(2,1)}', space=vmem, size = 0x4000, scoped, tag = 'scratch operand']
  #allocation3 [shape = 'bf16[4,16,16]{2,1,0:T(8,128)(2,1)}', space=vmem, size = 0x4000, scoped, tag = 'scratch operand']
  %s0 = inlined_call_operand.vmem [shape: f32[16,16], index: 0, kind: input, shape index: {}]
  %s1 = inlined_call_operand.hbm [shape: bf16[2,16,32], index: 1, kind: input, shape index: {}]
  %s2 = inlined_call_operand.vmem [shape: f32[2,16,32], index: 2, kind: input, shape index: {}]
  %s3 = inlined_call_operand.hbm [shape: bf16[32,64], index: 3, kind: input, shape index: {}]
  %s4 = inlined_call_operand.hbm [shape: bf16[32,64], index: 4, kind: input, shape index: {}]
  %s5 = inlined_call_operand.hbm [shape: bf16[32,64], index: 5, kind: input, shape index: {}]
  %s6 = inlined_call_operand.vmem [shape: bf16[4,16,32], index: 6, kind: input, shape index: {}]
  %s7 = inlined_call_operand.vmem [shape: f32[1,32], index: 7, kind: input, shape index: {}]
  %s8 = inlined_call_operand.vmem [shape: f32[1,32], index: 8, kind: input, shape index: {}]
  %s9 = inlined_call_operand.vmem [shape: f32[1,32], index: 9, kind: input, shape index: {}]
  %s10 = inlined_call_operand.hbm [shape: bf16[32,128], index: 10, kind: input, shape index: {}]
  %s11 = inlined_call_operand.vmem [shape: f32[1,128], index: 11, kind: input, shape index: {}]
  %s12 = inlined_call_operand.vmem [shape: bf16[128,32], index: 12, kind: input, shape index: {}]
  %s13 = inlined_call_operand.vmem [shape: f32[1,32], index: 13, kind: input, shape index: {}]
  %s14 = inlined_call_operand.vmem [shape: f32[1,32], index: 14, kind: input, shape index: {}]
  %s15 = inlined_call_operand.vmem [shape: f32[1,32], index: 15, kind: input, shape index: {}]
  %s16 = inlined_call_operand.hbm [shape: f32[2,16,32], index: 16, kind: output, shape index: {}]
  %s17 = sld [smem:[#allocation0]]
  $region121: #{tpu_custom_call.1} parent=0
    _
  %s19 = ssub.s32 1, %s17
  %s20 = scalar_select 0, %s19, %s17
  $region1: #{tpu_custom_call.1} parent=0
    #allocation4 [shape = 'u8[8192]{0}', space=vmem, size = 0x2000, scoped, tag = 'input window, operand 1']
    #allocation5 [shape = 's32[2]{0}', space=sflag, size = 0x8, scoped, tag = 'scoped memory for tpu_custom_call.1']
    #allocation6 [shape = 's32[2]{0}', space=sflag, size = 0x8, scoped, tag = 'scoped memory for tpu_custom_call.1']
    #allocation7 [shape = 'u8[8192]{0}', space=vmem, size = 0x2000, scoped, tag = 'input window, operand 3, single buffered']
    #allocation8 [shape = 's32[1]{0}', space=sflag, size = 0x4, scoped, tag = 'scoped memory for tpu_custom_call.1']
    #allocation9 [shape = 'u8[8192]{0}', space=vmem, size = 0x2000, scoped, tag = 'input window, operand 4, single buffered']
    #allocation10 [shape = 'u8[8192]{0}', space=vmem, size = 0x2000, scoped, tag = 'input window, operand 5, single buffered']
    #allocation11 [shape = 's32[1]{0}', space=sflag, size = 0x4, scoped, tag = 'scoped memory for tpu_custom_call.1']
    #allocation12 [shape = 'u8[8192]{0}', space=vmem, size = 0x2000, scoped, tag = 'input window, operand 10, single buffered']
    #allocation13 [shape = 'u8[8192]{0}', space=vmem, size = 0x2000, scoped, tag = 'output window, operand 0']
    %21 = vsyncpa [#allocation5], 0
    %s22 = scalar_lea.sflag [#allocation5], 1
    %23 = vsyncpa %s22, 0
    %24 = vsyncpa [#allocation8], 0
    %25 = vsyncpa [#allocation11], 0
    %26 = vsyncpa [#allocation6], 0
    %s27 = scalar_lea.sflag [#allocation6], 1
    %28 = vsyncpa %s27, 0
    loop: start=0, step=1, limit=6
    $region2: #{tpu_custom_call.1} parent=1 // loop_pre_header
      _
    $region3: #{tpu_custom_call.1} parent=1 // loop_header
      %s30 = sphi 0, %s34
      %p31 = scmp.ge.s32.totalorder %s30, 6
      %s37 = sphi 0, %s49
      %s38 = sphi 0, %s45
      %s39 = sphi 0, %s37
      %s40 = sphi 0, %s38
      %s41 = sphi 0, %s39
      %s42 = sphi 0, %s40
      %s52 = sphi 0, %s54
      %s55 = sphi 0, %s52
      %s56 = sphi 0, %s55
      %s72 = sphi 0, %s56
      %s78 = sphi 0, %s80
      %s81 = sphi 0, %s78
      %s82 = sphi 0, %s81
      %s98 = sphi 0, %s82
      %s106 = sphi 0, %s108
      %s109 = sphi 0, %s106
      %s110 = sphi 0, %s109
      %s126 = sphi 0, %s110
      %s130 = sphi 0, %s130
      %s132 = sphi 0, %s130
      %s133 = sphi 0, %s132
      %s147 = sphi 0, %s133
      %s151 = sphi 0, %s151
      %s153 = sphi 0, %s151
      %s154 = sphi 0, %s153
      %s168 = sphi 0, %s154
      %s172 = sphi 0, %s172
      %s174 = sphi 0, %s172
      %s175 = sphi 0, %s174
      %s189 = sphi 0, %s175
      %s193 = sphi 0, %s193
      %s195 = sphi 0, %s193
      %s196 = sphi 0, %s195
      %s210 = sphi 0, %s196
      %s214 = sphi 0, %s214
      %s216 = sphi 0, %s214
      %s217 = sphi 0, %s216
      %s231 = sphi 0, %s217
      %s235 = sphi 0, %s235
      %s237 = sphi 0, %s235
      %s238 = sphi 0, %s237
      %s252 = sphi 0, %s238
      %s256 = sphi 0, %s256
      %s258 = sphi 0, %s256
      %s259 = sphi 0, %s258
      %s273 = sphi 0, %s259
      %s277 = sphi 0, %s277
      %s279 = sphi 0, %s277
      %s280 = sphi 0, %s279
      %s294 = sphi 0, %s280
      %s298 = sphi 0, %s298
      %s300 = sphi 0, %s298
      %s301 = sphi 0, %s300
      %s315 = sphi 0, %s301
      %s319 = sphi 0, %s319
      %s321 = sphi 0, %s319
      %s322 = sphi 0, %s321
      %s336 = sphi 0, %s322
      %s340 = sphi 0, %s340
      %s342 = sphi 0, %s340
      %s343 = sphi 0, %s342
      %s357 = sphi 0, %s343
      %s361 = sphi 0, %s361
      %s363 = sphi 0, %s361
      %s364 = sphi 0, %s363
      %s378 = sphi 0, %s364
      %s382 = sphi 0, %s382
      %s384 = sphi 0, %s382
      %s385 = sphi 0, %s384
      %s399 = sphi 0, %s385
      %s407 = sphi 0, %s409
      %s410 = sphi 0, %s407
      %s411 = sphi 0, %s410
      %s427 = sphi 0, %s411
    $region4: #{tpu_custom_call.1} parent=1 // loop_header_branch
      %33 = sbr.rel (%p31) target = $region8
    $region5: #{tpu_custom_call.1} parent=1 // loop_body
      %s35 = ssub.s32 %s30, 1
      %s36 = ssub.s32 %s30, 2
      %s43 = sadd.s32 1, %s38
      %p44 = scmp.ge.s32.totalorder %s43, 2
      %s45 = scalar_select %p44, 0, %s43
      %s46 = sadd.s32 1, %s37
      %s47 = scalar_select %p44, %s46, %s37
      %p48 = scmp.ge.s32.totalorder %s47, 2
      %s49 = scalar_select %p48, 0, %s47
      %s50 = ssub.s32 %s38, %s45
      %p51 = scmp.eq.s32.totalorder %s50, 0
      %s53 = sadd.s32 %s52, 1
      %s54 = scalar_select %p51, %s52, %s53
      %p57 = pneg %p51
      %p58 = scmp.eq.s32.totalorder %s30, 3
      %p59 = por %p57, %p58
      %p60 = scmp.ne.s32.totalorder %s52, %s55
      %p61 = scmp.eq.s32.totalorder %s30, 0
      %p62 = por %p60, %p61
      %p63 = scmp.ne.s32.totalorder %s52, %s55
      %p64 = scmp.eq.s32.totalorder %s35, 3
      %p65 = por %p63, %p64
      %p66 = scmp.ne.s32.totalorder %s55, %s56
      %p67 = scmp.eq.s32.totalorder %s35, 0
      %p68 = por %p66, %p67
      %p69 = scmp.ne.s32.totalorder %s55, %s56
      %p70 = scmp.eq.s32.totalorder %s36, 3
      %p71 = por %p69, %p70
      %p73 = scmp.ne.s32.totalorder %s56, %s72
      %p74 = scmp.eq.s32.totalorder %s36, 0
      %p75 = por %p73, %p74
      %s76 = ssub.s32 %s37, %s49
      %p77 = scmp.eq.s32.totalorder %s76, 0
      %s79 = sadd.s32 %s78, 1
      %s80 = scalar_select %p77, %s78, %s79
      %p83 = pneg %p77
      %p84 = scmp.eq.s32.totalorder %s30, 3
      %p85 = por %p83, %p84
      %p86 = scmp.ne.s32.totalorder %s78, %s81
      %p87 = scmp.eq.s32.totalorder %s30, 0
      %p88 = por %p86, %p87
      %p89 = scmp.ne.s32.totalorder %s78, %s81
      %p90 = scmp.eq.s32.totalorder %s35, 3
      %p91 = por %p89, %p90
      %p92 = scmp.ne.s32.totalorder %s81, %s82
      %p93 = scmp.eq.s32.totalorder %s35, 0
      %p94 = por %p92, %p93
      %p95 = scmp.ne.s32.totalorder %s81, %s82
      %p96 = scmp.eq.s32.totalorder %s36, 3
      %p97 = por %p95, %p96
      %p99 = scmp.ne.s32.totalorder %s82, %s98
      %p100 = scmp.eq.s32.totalorder %s36, 0
      %p101 = por %p99, %p100
      %s102 = ssub.s32 %s37, %s49
      %s103 = ssub.s32 %s38, %s45
      %s104 = sor.u32 %s102, %s103
      %p105 = scmp.eq.s32.totalorder %s104, 0
      %s107 = sadd.s32 %s106, 1
      %s108 = scalar_select %p105, %s106, %s107
      %p111 = pneg %p105
      %p112 = scmp.eq.s32.totalorder %s30, 3
      %p113 = por %p111, %p112
      %p114 = scmp.ne.s32.totalorder %s106, %s109
      %p115 = scmp.eq.s32.totalorder %s30, 0
      %p116 = por %p114, %p115
      %p117 = scmp.ne.s32.totalorder %s106, %s109
      %p118 = scmp.eq.s32.totalorder %s35, 3
      %p119 = por %p117, %p118
      %p120 = scmp.ne.s32.totalorder %s109, %s110
      %p121 = scmp.eq.s32.totalorder %s35, 0
      %p122 = por %p120, %p121
      %p123 = scmp.ne.s32.totalorder %s109, %s110
      %p124 = scmp.eq.s32.totalorder %s36, 3
      %p125 = por %p123, %p124
      %p127 = scmp.ne.s32.totalorder %s110, %s126
      %p128 = scmp.eq.s32.totalorder %s36, 0
      %p129 = por %p127, %p128
      %s131 = sadd.s32 %s130, 1
      %p134 = scmp.eq.s32.totalorder %s30, 3
      %p135 = scmp.ne.s32.totalorder %s130, %s132
      %p136 = scmp.eq.s32.totalorder %s30, 0
      %p137 = por %p135, %p136
      %p138 = scmp.ne.s32.totalorder %s130, %s132
      %p139 = scmp.eq.s32.totalorder %s35, 3
      %p140 = por %p138, %p139
      %p141 = scmp.ne.s32.totalorder %s132, %s133
      %p142 = scmp.eq.s32.totalorder %s35, 0
      %p143 = por %p141, %p142
      %p144 = scmp.ne.s32.totalorder %s132, %s133
      %p145 = scmp.eq.s32.totalorder %s36, 3
      %p146 = por %p144, %p145
      %p148 = scmp.ne.s32.totalorder %s133, %s147
      %p149 = scmp.eq.s32.totalorder %s36, 0
      %p150 = por %p148, %p149
      %s152 = sadd.s32 %s151, 1
      %p155 = scmp.eq.s32.totalorder %s30, 3
      %p156 = scmp.ne.s32.totalorder %s151, %s153
      %p157 = scmp.eq.s32.totalorder %s30, 0
      %p158 = por %p156, %p157
      %p159 = scmp.ne.s32.totalorder %s151, %s153
      %p160 = scmp.eq.s32.totalorder %s35, 3
      %p161 = por %p159, %p160
      %p162 = scmp.ne.s32.totalorder %s153, %s154
      %p163 = scmp.eq.s32.totalorder %s35, 0
      %p164 = por %p162, %p163
      %p165 = scmp.ne.s32.totalorder %s153, %s154
      %p166 = scmp.eq.s32.totalorder %s36, 3
      %p167 = por %p165, %p166
      %p169 = scmp.ne.s32.totalorder %s154, %s168
      %p170 = scmp.eq.s32.totalorder %s36, 0
      %p171 = por %p169, %p170
      %s173 = sadd.s32 %s172, 1
      %p176 = scmp.eq.s32.totalorder %s30, 3
      %p177 = scmp.ne.s32.totalorder %s172, %s174
      %p178 = scmp.eq.s32.totalorder %s30, 0
      %p179 = por %p177, %p178
      %p180 = scmp.ne.s32.totalorder %s172, %s174
      %p181 = scmp.eq.s32.totalorder %s35, 3
      %p182 = por %p180, %p181
      %p183 = scmp.ne.s32.totalorder %s174, %s175
      %p184 = scmp.eq.s32.totalorder %s35, 0
      %p185 = por %p183, %p184
      %p186 = scmp.ne.s32.totalorder %s174, %s175
      %p187 = scmp.eq.s32.totalorder %s36, 3
      %p188 = por %p186, %p187
      %p190 = scmp.ne.s32.totalorder %s175, %s189
      %p191 = scmp.eq.s32.totalorder %s36, 0
      %p192 = por %p190, %p191
      %s194 = sadd.s32 %s193, 1
      %p197 = scmp.eq.s32.totalorder %s30, 3
      %p198 = scmp.ne.s32.totalorder %s193, %s195
      %p199 = scmp.eq.s32.totalorder %s30, 0
      %p200 = por %p198, %p199
      %p201 = scmp.ne.s32.totalorder %s193, %s195
      %p202 = scmp.eq.s32.totalorder %s35, 3
      %p203 = por %p201, %p202
      %p204 = scmp.ne.s32.totalorder %s195, %s196
      %p205 = scmp.eq.s32.totalorder %s35, 0
      %p206 = por %p204, %p205
      %p207 = scmp.ne.s32.totalorder %s195, %s196
      %p208 = scmp.eq.s32.totalorder %s36, 3
      %p209 = por %p207, %p208
      %p211 = scmp.ne.s32.totalorder %s196, %s210
      %p212 = scmp.eq.s32.totalorder %s36, 0
      %p213 = por %p211, %p212
      %s215 = sadd.s32 %s214, 1
      %p218 = scmp.eq.s32.totalorder %s30, 3
      %p219 = scmp.ne.s32.totalorder %s214, %s216
      %p220 = scmp.eq.s32.totalorder %s30, 0
      %p221 = por %p219, %p220
      %p222 = scmp.ne.s32.totalorder %s214, %s216
      %p223 = scmp.eq.s32.totalorder %s35, 3
      %p224 = por %p222, %p223
      %p225 = scmp.ne.s32.totalorder %s216, %s217
      %p226 = scmp.eq.s32.totalorder %s35, 0
      %p227 = por %p225, %p226
      %p228 = scmp.ne.s32.totalorder %s216, %s217
      %p229 = scmp.eq.s32.totalorder %s36, 3
      %p230 = por %p228, %p229
      %p232 = scmp.ne.s32.totalorder %s217, %s231
      %p233 = scmp.eq.s32.totalorder %s36, 0
      %p234 = por %p232, %p233
      %s236 = sadd.s32 %s235, 1
      %p239 = scmp.eq.s32.totalorder %s30, 3
      %p240 = scmp.ne.s32.totalorder %s235, %s237
      %p241 = scmp.eq.s32.totalorder %s30, 0
      %p242 = por %p240, %p241
      %p243 = scmp.ne.s32.totalorder %s235, %s237
      %p244 = scmp.eq.s32.totalorder %s35, 3
      %p245 = por %p243, %p244
      %p246 = scmp.ne.s32.totalorder %s237, %s238
      %p247 = scmp.eq.s32.totalorder %s35, 0
      %p248 = por %p246, %p247
      %p249 = scmp.ne.s32.totalorder %s237, %s238
      %p250 = scmp.eq.s32.totalorder %s36, 3
      %p251 = por %p249, %p250
      %p253 = scmp.ne.s32.totalorder %s238, %s252
      %p254 = scmp.eq.s32.totalorder %s36, 0
      %p255 = por %p253, %p254
      %s257 = sadd.s32 %s256, 1
      %p260 = scmp.eq.s32.totalorder %s30, 3
      %p261 = scmp.ne.s32.totalorder %s256, %s258
      %p262 = scmp.eq.s32.totalorder %s30, 0
      %p263 = por %p261, %p262
      %p264 = scmp.ne.s32.totalorder %s256, %s258
      %p265 = scmp.eq.s32.totalorder %s35, 3
      %p266 = por %p264, %p265
      %p267 = scmp.ne.s32.totalorder %s258, %s259
      %p268 = scmp.eq.s32.totalorder %s35, 0
      %p269 = por %p267, %p268
      %p270 = scmp.ne.s32.totalorder %s258, %s259
      %p271 = scmp.eq.s32.totalorder %s36, 3
      %p272 = por %p270, %p271
      %p274 = scmp.ne.s32.totalorder %s259, %s273
      %p275 = scmp.eq.s32.totalorder %s36, 0
      %p276 = por %p274, %p275
      %s278 = sadd.s32 %s277, 1
      %p281 = scmp.eq.s32.totalorder %s30, 3
      %p282 = scmp.ne.s32.totalorder %s277, %s279
      %p283 = scmp.eq.s32.totalorder %s30, 0
      %p284 = por %p282, %p283
      %p285 = scmp.ne.s32.totalorder %s277, %s279
      %p286 = scmp.eq.s32.totalorder %s35, 3
      %p287 = por %p285, %p286
      %p288 = scmp.ne.s32.totalorder %s279, %s280
      %p289 = scmp.eq.s32.totalorder %s35, 0
      %p290 = por %p288, %p289
      %p291 = scmp.ne.s32.totalorder %s279, %s280
      %p292 = scmp.eq.s32.totalorder %s36, 3
      %p293 = por %p291, %p292
      %p295 = scmp.ne.s32.totalorder %s280, %s294
      %p296 = scmp.eq.s32.totalorder %s36, 0
      %p297 = por %p295, %p296
      %s299 = sadd.s32 %s298, 1
      %p302 = scmp.eq.s32.totalorder %s30, 3
      %p303 = scmp.ne.s32.totalorder %s298, %s300
      %p304 = scmp.eq.s32.totalorder %s30, 0
      %p305 = por %p303, %p304
      %p306 = scmp.ne.s32.totalorder %s298, %s300
      %p307 = scmp.eq.s32.totalorder %s35, 3
      %p308 = por %p306, %p307
      %p309 = scmp.ne.s32.totalorder %s300, %s301
      %p310 = scmp.eq.s32.totalorder %s35, 0
      %p311 = por %p309, %p310
      %p312 = scmp.ne.s32.totalorder %s300, %s301
      %p313 = scmp.eq.s32.totalorder %s36, 3
      %p314 = por %p312, %p313
      %p316 = scmp.ne.s32.totalorder %s301, %s315
      %p317 = scmp.eq.s32.totalorder %s36, 0
      %p318 = por %p316, %p317
      %s320 = sadd.s32 %s319, 1
      %p323 = scmp.eq.s32.totalorder %s30, 3
      %p324 = scmp.ne.s32.totalorder %s319, %s321
      %p325 = scmp.eq.s32.totalorder %s30, 0
      %p326 = por %p324, %p325
      %p327 = scmp.ne.s32.totalorder %s319, %s321
      %p328 = scmp.eq.s32.totalorder %s35, 3
      %p329 = por %p327, %p328
      %p330 = scmp.ne.s32.totalorder %s321, %s322
      %p331 = scmp.eq.s32.totalorder %s35, 0
      %p332 = por %p330, %p331
      %p333 = scmp.ne.s32.totalorder %s321, %s322
      %p334 = scmp.eq.s32.totalorder %s36, 3
      %p335 = por %p333, %p334
      %p337 = scmp.ne.s32.totalorder %s322, %s336
      %p338 = scmp.eq.s32.totalorder %s36, 0
      %p339 = por %p337, %p338
      %s341 = sadd.s32 %s340, 1
      %p344 = scmp.eq.s32.totalorder %s30, 3
      %p345 = scmp.ne.s32.totalorder %s340, %s342
      %p346 = scmp.eq.s32.totalorder %s30, 0
      %p347 = por %p345, %p346
      %p348 = scmp.ne.s32.totalorder %s340, %s342
      %p349 = scmp.eq.s32.totalorder %s35, 3
      %p350 = por %p348, %p349
      %p351 = scmp.ne.s32.totalorder %s342, %s343
      %p352 = scmp.eq.s32.totalorder %s35, 0
      %p353 = por %p351, %p352
      %p354 = scmp.ne.s32.totalorder %s342, %s343
      %p355 = scmp.eq.s32.totalorder %s36, 3
      %p356 = por %p354, %p355
      %p358 = scmp.ne.s32.totalorder %s343, %s357
      %p359 = scmp.eq.s32.totalorder %s36, 0
      %p360 = por %p358, %p359
      %s362 = sadd.s32 %s361, 1
      %p365 = scmp.eq.s32.totalorder %s30, 3
      %p366 = scmp.ne.s32.totalorder %s361, %s363
      %p367 = scmp.eq.s32.totalorder %s30, 0
      %p368 = por %p366, %p367
      %p369 = scmp.ne.s32.totalorder %s361, %s363
      %p370 = scmp.eq.s32.totalorder %s35, 3
      %p371 = por %p369, %p370
      %p372 = scmp.ne.s32.totalorder %s363, %s364
      %p373 = scmp.eq.s32.totalorder %s35, 0
      %p374 = por %p372, %p373
      %p375 = scmp.ne.s32.totalorder %s363, %s364
      %p376 = scmp.eq.s32.totalorder %s36, 3
      %p377 = por %p375, %p376
      %p379 = scmp.ne.s32.totalorder %s364, %s378
      %p380 = scmp.eq.s32.totalorder %s36, 0
      %p381 = por %p379, %p380
      %s383 = sadd.s32 %s382, 1
      %p386 = scmp.eq.s32.totalorder %s30, 3
      %p387 = scmp.ne.s32.totalorder %s382, %s384
      %p388 = scmp.eq.s32.totalorder %s30, 0
      %p389 = por %p387, %p388
      %p390 = scmp.ne.s32.totalorder %s382, %s384
      %p391 = scmp.eq.s32.totalorder %s35, 3
      %p392 = por %p390, %p391
      %p393 = scmp.ne.s32.totalorder %s384, %s385
      %p394 = scmp.eq.s32.totalorder %s35, 0
      %p395 = por %p393, %p394
      %p396 = scmp.ne.s32.totalorder %s384, %s385
      %p397 = scmp.eq.s32.totalorder %s36, 3
      %p398 = por %p396, %p397
      %p400 = scmp.ne.s32.totalorder %s385, %s399
      %p401 = scmp.eq.s32.totalorder %s36, 0
      %p402 = por %p400, %p401
      %s403 = ssub.s32 %s37, %s49
      %s404 = ssub.s32 %s38, %s45
      %s405 = sor.u32 %s403, %s404
      %p406 = scmp.eq.s32.totalorder %s405, 0
      %s408 = sadd.s32 %s407, 1
      %s409 = scalar_select %p406, %s407, %s408
      %p412 = pneg %p406
      %p413 = scmp.eq.s32.totalorder %s30, 3
      %p414 = por %p412, %p413
      %p415 = scmp.ne.s32.totalorder %s407, %s410
      %p416 = scmp.eq.s32.totalorder %s30, 0
      %p417 = por %p415, %p416
      %p418 = scmp.ne.s32.totalorder %s407, %s410
      %p419 = scmp.eq.s32.totalorder %s35, 3
      %p420 = por %p418, %p419
      %p421 = scmp.ne.s32.totalorder %s410, %s411
      %p422 = scmp.eq.s32.totalorder %s35, 0
      %p423 = por %p421, %p422
      %p424 = scmp.ne.s32.totalorder %s410, %s411
      %p425 = scmp.eq.s32.totalorder %s36, 3
      %p426 = por %p424, %p425
      %p428 = scmp.ne.s32.totalorder %s411, %s427
      %p429 = scmp.eq.s32.totalorder %s36, 0
      %p430 = por %p428, %p429
      %p431 = scmp.le.s32.totalorder 1, %s30
      %p432 = scmp.lt.s32.totalorder %s30, 5
      %p433 = pnand %p431, %p432
      %p434 = pneg %p433
      // Predicated region
      $region9: #{tpu_custom_call.1} parent=5 // pred_check
        _
      $region10: #{tpu_custom_call.1} parent=5 // pred_check_branch
        %436 = sbr.rel (%p433) target = $region12
      $region11: #{tpu_custom_call.1} parent=5 // pred_region
        %s437 = ssub.s32 %s30, 1
        // Predicated region
        $region13: #{tpu_custom_call.1} parent=11 // pred_check
          %p438 = pneg %p143
        $region14: #{tpu_custom_call.1} parent=11 // pred_check_branch
          %440 = sbr.rel (%p438) target = $region16
        $region15: #{tpu_custom_call.1} parent=11 // pred_region
          %s442 = ssub.s32 256, 256
          %443 = vsyncadd [#allocation8], %s442
          %s444 = sshll.u32 [#allocation7], 4
          %s445 = int_to_ptr.vmem [resolvable:$true] %s444
          %450 = dma.hbm_to_vmem [thread:$0]  %s3, 256, %s445, [#allocation8], 64, 64, 4
        $region16: #{tpu_custom_call.1} parent=11 // pred_fallthru
          _
        // Predicated region
        $region17: #{tpu_custom_call.1} parent=11 // pred_check
          %p451 = pneg %p164
        $region18: #{tpu_custom_call.1} parent=11 // pred_check_branch
          %453 = sbr.rel (%p451) target = $region20
        $region19: #{tpu_custom_call.1} parent=11 // pred_region
          %s455 = ssub.s32 256, 256
          %456 = vsyncadd [#allocation8], %s455
          %s457 = sshll.u32 [#allocation9], 4
          %s458 = int_to_ptr.vmem [resolvable:$true] %s457
          %463 = dma.hbm_to_vmem [thread:$0]  %s4, 256, %s458, [#allocation8], 64, 64, 4
        $region20: #{tpu_custom_call.1} parent=11 // pred_fallthru
          _
        // Predicated region
        $region21: #{tpu_custom_call.1} parent=11 // pred_check
          %p464 = pneg %p185
        $region22: #{tpu_custom_call.1} parent=11 // pred_check_branch
          %466 = sbr.rel (%p464) target = $region24
        $region23: #{tpu_custom_call.1} parent=11 // pred_region
          %s468 = ssub.s32 256, 256
          %469 = vsyncadd [#allocation11], %s468
          %s470 = sshll.u32 [#allocation10], 4
          %s471 = int_to_ptr.vmem [resolvable:$true] %s470
          %476 = dma.hbm_to_vmem [thread:$0]  %s5, 256, %s471, [#allocation11], 64, 64, 4
        $region24: #{tpu_custom_call.1} parent=11 // pred_fallthru
          _
        // Predicated region
        $region25: #{tpu_custom_call.1} parent=11 // pred_check
          %p477 = pneg %p206
        $region26: #{tpu_custom_call.1} parent=11 // pred_check_branch
          %479 = sbr.rel (%p477) target = $region28
        $region27: #{tpu_custom_call.1} parent=11 // pred_region
          _
        $region28: #{tpu_custom_call.1} parent=11 // pred_fallthru
          _
        // Predicated region
        $region29: #{tpu_custom_call.1} parent=11 // pred_check
          %p480 = pneg %p227
        $region30: #{tpu_custom_call.1} parent=11 // pred_check_branch
          %482 = sbr.rel (%p480) target = $region32
        $region31: #{tpu_custom_call.1} parent=11 // pred_region
          _
        $region32: #{tpu_custom_call.1} parent=11 // pred_fallthru
          _
        // Predicated region
        $region33: #{tpu_custom_call.1} parent=11 // pred_check
          %p483 = pneg %p248
        $region34: #{tpu_custom_call.1} parent=11 // pred_check_branch
          %485 = sbr.rel (%p483) target = $region36
        $region35: #{tpu_custom_call.1} parent=11 // pred_region
          _
        $region36: #{tpu_custom_call.1} parent=11 // pred_fallthru
          _
        // Predicated region
        $region37: #{tpu_custom_call.1} parent=11 // pred_check
          %p486 = pneg %p269
        $region38: #{tpu_custom_call.1} parent=11 // pred_check_branch
          %488 = sbr.rel (%p486) target = $region40
        $region39: #{tpu_custom_call.1} parent=11 // pred_region
          _
        $region40: #{tpu_custom_call.1} parent=11 // pred_fallthru
          _
        // Predicated region
        $region41: #{tpu_custom_call.1} parent=11 // pred_check
          %p489 = pneg %p290
        $region42: #{tpu_custom_call.1} parent=11 // pred_check_branch
          %491 = sbr.rel (%p489) target = $region44
        $region43: #{tpu_custom_call.1} parent=11 // pred_region
          %s493 = ssub.s32 256, 256
          %494 = vsyncadd [#allocation11], %s493
          %s495 = sshll.u32 [#allocation12], 4
          %s496 = int_to_ptr.vmem [resolvable:$true] %s495
          %501 = dma.hbm_to_vmem [thread:$0]  %s10, 256, %s496, [#allocation11], 64, 64, 4
        $region44: #{tpu_custom_call.1} parent=11 // pred_fallthru
          _
        // Predicated region
        $region45: #{tpu_custom_call.1} parent=11 // pred_check
          %p502 = pneg %p311
        $region46: #{tpu_custom_call.1} parent=11 // pred_check_branch
          %504 = sbr.rel (%p502) target = $region48
        $region47: #{tpu_custom_call.1} parent=11 // pred_region
          _
        $region48: #{tpu_custom_call.1} parent=11 // pred_fallthru
          _
        // Predicated region
        $region49: #{tpu_custom_call.1} parent=11 // pred_check
          %p505 = pneg %p332
        $region50: #{tpu_custom_call.1} parent=11 // pred_check_branch
          %507 = sbr.rel (%p505) target = $region52
        $region51: #{tpu_custom_call.1} parent=11 // pred_region
          _
        $region52: #{tpu_custom_call.1} parent=11 // pred_fallthru
          _
        // Predicated region
        $region53: #{tpu_custom_call.1} parent=11 // pred_check
          %p508 = pneg %p353
        $region54: #{tpu_custom_call.1} parent=11 // pred_check_branch
          %510 = sbr.rel (%p508) target = $region56
        $region55: #{tpu_custom_call.1} parent=11 // pred_region
          _
        $region56: #{tpu_custom_call.1} parent=11 // pred_fallthru
          _
        // Predicated region
        $region57: #{tpu_custom_call.1} parent=11 // pred_check
          %p511 = pneg %p374
        $region58: #{tpu_custom_call.1} parent=11 // pred_check_branch
          %513 = sbr.rel (%p511) target = $region60
        $region59: #{tpu_custom_call.1} parent=11 // pred_region
          _
        $region60: #{tpu_custom_call.1} parent=11 // pred_fallthru
          _
        // Predicated region
        $region61: #{tpu_custom_call.1} parent=11 // pred_check
          %p514 = pneg %p395
        $region62: #{tpu_custom_call.1} parent=11 // pred_check_branch
          %516 = sbr.rel (%p514) target = $region64
        $region63: #{tpu_custom_call.1} parent=11 // pred_region
          _
        $region64: #{tpu_custom_call.1} parent=11 // pred_fallthru
          _
      $region12: #{tpu_custom_call.1} parent=5 // pred_fallthru
        _
      %p517 = scmp.lt.s32.totalorder %s30, 4
      // Predicated region
      $region65: #{tpu_custom_call.1} parent=5 // pred_check
        %p518 = pneg %p517
      $region66: #{tpu_custom_call.1} parent=5 // pred_check_branch
        %520 = sbr.rel (%p518) target = $region68
      $region67: #{tpu_custom_call.1} parent=5 // pred_region
        // Predicated region
        $region69: #{tpu_custom_call.1} parent=67 // pred_check
          %p521 = pneg %p62
        $region70: #{tpu_custom_call.1} parent=67 // pred_check_branch
          %523 = sbr.rel (%p521) target = $region72
        $region71: #{tpu_custom_call.1} parent=67 // pred_region
          %p524 = scmp.lt.s32.totalorder %s38, 1
          %s525 = scalar_select %p524, %s38, 1
          %s526 = smul.addr %s525, 8
          %s527 = scalar_lea.vmem %s0, %s526
        $region72: #{tpu_custom_call.1} parent=67 // pred_fallthru
          _
        // Predicated region
        $region73: #{tpu_custom_call.1} parent=67 // pred_check
          %p528 = pneg %p88
        $region74: #{tpu_custom_call.1} parent=67 // pred_check_branch
          %530 = sbr.rel (%p528) target = $region76
        $region75: #{tpu_custom_call.1} parent=67 // pred_region
          %s531 = sand.u32 %s78, 1
          %s532 = scalar_lea.sflag [#allocation5], %s531
          %s533 = sand.u32 %s78, 1
          %s534 = smul.addr %s533, 8
          %s535 = scalar_lea.vmem [#allocation4], %s534
          %s537 = ssub.s32 128, 128
          %538 = vsyncadd %s532, %s537
          %s539 = smul.addr %s37, 2
          %s540 = smul.addr %s539, 64
          %s541 = scalar_lea.hbm %s1, %s540
          %s542 = sshll.u32 %s535, 4
          %s543 = int_to_ptr.vmem [resolvable:$true] %s542
          %548 = dma.hbm_to_vmem [thread:$0]  %s541, 128, %s543, %s532, 64, 64, 4
        $region76: #{tpu_custom_call.1} parent=67 // pred_fallthru
          _
        // Predicated region
        $region77: #{tpu_custom_call.1} parent=67 // pred_check
          %p549 = pneg %p116
        $region78: #{tpu_custom_call.1} parent=67 // pred_check_branch
          %551 = sbr.rel (%p549) target = $region80
        $region79: #{tpu_custom_call.1} parent=67 // pred_region
          %p552 = scmp.lt.s32.totalorder %s37, 1
          %s553 = scalar_select %p552, %s37, 1
          %p554 = scmp.lt.s32.totalorder %s38, 1
          %s555 = scalar_select %p554, %s38, 1
          %s556 = smul.addr %s553, 2
          %s557 = sadd.s32 %s555, %s556
          %s558 = smul.addr %s557, 8
          %s559 = scalar_lea.vmem %s2, %s558
        $region80: #{tpu_custom_call.1} parent=67 // pred_fallthru
          _
      $region68: #{tpu_custom_call.1} parent=5 // pred_fallthru
        _
      %p560 = scmp.le.s32.totalorder 1, %s30
      %p561 = scmp.lt.s32.totalorder %s30, 5
      %p562 = pnand %p560, %p561
      %p563 = pneg %p562
      // Predicated region
      $region81: #{tpu_custom_call.1} parent=5 // pred_check
        _
      $region82: #{tpu_custom_call.1} parent=5 // pred_check_branch
        %565 = sbr.rel (%p562) target = $region84
      $region83: #{tpu_custom_call.1} parent=5 // pred_region
        %s566 = ssub.s32 %s30, 1
        %s567 = sand.u32 %s81, 1
        %s568 = scalar_lea.sflag [#allocation5], %s567
        %s569 = sand.u32 %s81, 1
        %s570 = smul.addr %s569, 8
        %s571 = scalar_lea.vmem [#allocation4], %s570
        // Predicated region
        $region85: #{tpu_custom_call.1} parent=83 // pred_check
          %p572 = pneg %p94
        $region86: #{tpu_custom_call.1} parent=83 // pred_check_branch
          %574 = sbr.rel (%p572) target = $region88
        $region87: #{tpu_custom_call.1} parent=83 // pred_region
          %575 = dma.done %s568, 128
        $region88: #{tpu_custom_call.1} parent=83 // pred_fallthru
          _
        // Predicated region
        $region89: #{tpu_custom_call.1} parent=83 // pred_check
          %p576 = pneg %p143
        $region90: #{tpu_custom_call.1} parent=83 // pred_check_branch
          %578 = sbr.rel (%p576) target = $region92
        $region91: #{tpu_custom_call.1} parent=83 // pred_region
          %579 = dma.done [#allocation8], 256
        $region92: #{tpu_custom_call.1} parent=83 // pred_fallthru
          _
        // Predicated region
        $region93: #{tpu_custom_call.1} parent=83 // pred_check
          %p580 = pneg %p164
        $region94: #{tpu_custom_call.1} parent=83 // pred_check_branch
          %582 = sbr.rel (%p580) target = $region96
        $region95: #{tpu_custom_call.1} parent=83 // pred_region
          %583 = dma.done [#allocation8], 256
        $region96: #{tpu_custom_call.1} parent=83 // pred_fallthru
          _
        // Predicated region
        $region97: #{tpu_custom_call.1} parent=83 // pred_check
          %p584 = pneg %p185
        $region98: #{tpu_custom_call.1} parent=83 // pred_check_branch
          %586 = sbr.rel (%p584) target = $region100
        $region99: #{tpu_custom_call.1} parent=83 // pred_region
          %587 = dma.done [#allocation11], 256
        $region100: #{tpu_custom_call.1} parent=83 // pred_fallthru
          _
        // Predicated region
        $region101: #{tpu_custom_call.1} parent=83 // pred_check
          %p588 = pneg %p290
        $region102: #{tpu_custom_call.1} parent=83 // pred_check_branch
          %590 = sbr.rel (%p588) target = $region104
        $region103: #{tpu_custom_call.1} parent=83 // pred_region
          %591 = dma.done [#allocation11], 256
        $region104: #{tpu_custom_call.1} parent=83 // pred_fallthru
          _
        %p592 = scmp.lt.s32.totalorder %s40, 1
        %s593 = scalar_select %p592, %s40, 1
        %s594 = smul.addr %s593, 8
        %s595 = scalar_lea.vmem %s0, %s594
        %p596 = pneg %p68
        %p597 = pneg %p65
        %s598 = sand.u32 %s81, 1
        %s599 = scalar_lea.sflag [#allocation5], %s598
        %s600 = sand.u32 %s81, 1
        %s601 = smul.addr %s600, 8
        %s602 = scalar_lea.vmem [#allocation4], %s601
        %p603 = pneg %p94
        %p604 = pneg %p91
        %p605 = scmp.lt.s32.totalorder %s39, 1
        %s606 = scalar_select %p605, %s39, 1
        %p607 = scmp.lt.s32.totalorder %s40, 1
        %s608 = scalar_select %p607, %s40, 1
        %s609 = smul.addr %s606, 2
        %s610 = sadd.s32 %s608, %s609
        %s611 = smul.addr %s610, 8
        %s612 = scalar_lea.vmem %s2, %s611
        %p613 = pneg %p122
        %p614 = pneg %p119
        %p615 = pneg %p143
        %p616 = pneg %p140
        %p617 = pneg %p164
        %p618 = pneg %p161
        %p619 = pneg %p185
        %p620 = pneg %p182
        %p621 = pneg %p206
        %p622 = pneg %p203
        %p623 = pneg %p227
        %p624 = pneg %p224
        %p625 = pneg %p248
        %p626 = pneg %p245
        %p627 = pneg %p269
        %p628 = pneg %p266
        %p629 = pneg %p290
        %p630 = pneg %p287
        %p631 = pneg %p311
        %p632 = pneg %p308
        %p633 = pneg %p332
        %p634 = pneg %p329
        %p635 = pneg %p353
        %p636 = pneg %p350
        %p637 = pneg %p374
        %p638 = pneg %p371
        %p639 = pneg %p395
        %p640 = pneg %p392
        %p641 = pneg %p423
        %p642 = pneg %p420
        %s643 = sand.u32 %s410, 1
        %s644 = scalar_lea.sflag [#allocation6], %s643
        %s645 = sand.u32 %s410, 1
        %s646 = smul.addr %s645, 8
        %s647 = scalar_lea.vmem [#allocation13], %s646
        %p648 = scmp.lt.s32.totalorder %s40, 1
        %s649 = scalar_select %p648, %s40, 1
        %s650 = smul.addr %s649, 8
        %s651 = scalar_lea.vmem %s0, %s650
        %p652 = scmp.lt.s32.totalorder %s39, 1
        %s653 = scalar_select %p652, %s39, 1
        %p654 = scmp.lt.s32.totalorder %s40, 1
        %s655 = scalar_select %p654, %s40, 1
        %s656 = smul.addr %s653, 2
        %s657 = sadd.s32 %s655, %s656
        %s658 = smul.addr %s657, 8
        %s659 = scalar_lea.vmem %s2, %s658
        %p661 = scmp.eq.s32.totalorder %s40, 0
        // Predicated region
        $region105: #{tpu_custom_call.1} parent=83 // pred_check
          %p662 = pneg %p661
        $region106: #{tpu_custom_call.1} parent=83 // pred_check_branch
          %664 = sbr.rel (%p662) target = $region108
        $region107: #{tpu_custom_call.1} parent=83 // pred_region
          %v665 = vld [vmem:[%s571] sm:$0xf]
          %v666 = vld [vmem:[%s571 + $0x4] sm:$0xf]
          %v667 = vld [vmem:[#allocation9] sm:$0xf]
          %v668 = vld [vmem:[#allocation9 + $0x4] sm:$0xf]
          %v669 = vld [vmem:[#allocation9 + $0x8] sm:$0xf]
          %v670 = vld [vmem:[#allocation9 + $0xc] sm:$0xf]
          %v673 = vunpack.c.l.b16 %v665
          %v674 = vunpack.c.l.b16 %v666
          %v675 = vpack.c.b16 %v674, %v673
          %v680 = vunpack.c.l.b16 %v667
          %v681 = vunpack.c.l.b16 %v668
          %v682 = vunpack.c.l.b16 %v669
          %v683 = vunpack.c.l.b16 %v670
          %v684 = vpack.c.b16 %v681, %v680
          %v685 = vpack.c.b16 %v683, %v682
          %vm688 = vcmask 261120
          %v690 = vsel %vm688, %v675, 0
          %692 = vmatprep.subr.bf16.mxu0 0
          %693 = vmatpush1.bf16.msra.mxu0 0
          %694 = vmatprep.subr.bf16.mxu0 0
          %695 = vmatpush1.bf16.msra.mxu0 0
          %696 = vmatprep.subr.bf16.mxu0 0
          %697 = vmatpush1.bf16.msra.mxu0 0
          %698 = vmatprep.subr.bf16.mxu0 0
          %699 = vmatpush1.bf16.msra.mxu0 0
          %700 = vmatprep.subr.bf16.mxu0 0
          %701 = vmatpush1.bf16.msra.mxu0 0
          %702 = vmatprep.subr.bf16.mxu0 0
          %703 = vmatpush1.bf16.msra.mxu0 0
          %704 = vmatprep.subr.bf16.mxu0 0
          %705 = vmatpush1.bf16.msra.mxu0 %v685
          %706 = vmatprep.subr.bf16.mxu0 0
          %707 = vmatpush1.bf16.msra.mxu0 %v684
          %708 = vmatprep.subr.bf16.mxu0 0
          %709 = vmatpush2.bf16.msra.mxu0 0
          %710 = vmatprep.subr.bf16.mxu0 0
          %711 = vmatpush2.bf16.msra.mxu0 0
          %712 = vmatprep.subr.bf16.mxu0 0
          %713 = vmatpush2.bf16.msra.mxu0 0
          %714 = vmatprep.subr.bf16.mxu0 0
          %715 = vmatpush2.bf16.msra.mxu0 0
          %716 = vmatprep.subr.bf16.mxu0 0
          %717 = vmatpush2.bf16.msra.mxu0 0
          %718 = vmatprep.subr.bf16.mxu0 0
          %719 = vmatpush2.bf16.msra.mxu0 0
          %720 = vmatprep.subr.bf16.mxu0 0
          %721 = vmatpush2.bf16.msra.mxu0 0
          %722 = vmatprep.subr.bf16.mxu0 0
          %723 = vmatpush2.bf16.msra.mxu0 0
          %724 = vmatprep.mubr.bf16.mxu0 0
          %725 = vmatmul.mubr.bf16.gmra.mxu0 %v690
          %v726 = vpop.f32.mrf.mxu0
          %v727 = vadd.f32 0.0, %v726
          %v728 = vpop.f32.mrf.mxu0
          %v729 = vpop.f32.mrf.mxu0
          %v730 = vadd.f32 0.0, %v729
          %v731 = vpop.f32.mrf.mxu0
          %732 = vdwg.mxu0
          %v733 = vld [vmem:[#allocation10] sm:$0xf]
          %v734 = vld [vmem:[#allocation10 + $0x4] sm:$0xf]
          %v735 = vld [vmem:[#allocation10 + $0x8] sm:$0xf]
          %v736 = vld [vmem:[#allocation10 + $0xc] sm:$0xf]
          %v741 = vunpack.c.l.b16 %v733
          %v742 = vunpack.c.l.b16 %v734
          %v743 = vunpack.c.l.b16 %v735
          %v744 = vunpack.c.l.b16 %v736
          %v745 = vpack.c.b16 %v742, %v741
          %v746 = vpack.c.b16 %v744, %v743
          %749 = vmatprep.subr.bf16.mxu0 0
          %750 = vmatpush1.bf16.msra.mxu0 0
          %751 = vmatprep.subr.bf16.mxu0 0
          %752 = vmatpush1.bf16.msra.mxu0 0
          %753 = vmatprep.subr.bf16.mxu0 0
          %754 = vmatpush1.bf16.msra.mxu0 0
          %755 = vmatprep.subr.bf16.mxu0 0
          %756 = vmatpush1.bf16.msra.mxu0 0
          %757 = vmatprep.subr.bf16.mxu0 0
          %758 = vmatpush1.bf16.msra.mxu0 0
          %759 = vmatprep.subr.bf16.mxu0 0
          %760 = vmatpush1.bf16.msra.mxu0 0
          %761 = vmatprep.subr.bf16.mxu0 0
          %762 = vmatpush1.bf16.msra.mxu0 %v746
          %763 = vmatprep.subr.bf16.mxu0 0
          %764 = vmatpush1.bf16.msra.mxu0 %v745
          %765 = vmatprep.subr.bf16.mxu0 0
          %766 = vmatpush2.bf16.msra.mxu0 0
          %767 = vmatprep.subr.bf16.mxu0 0
          %768 = vmatpush2.bf16.msra.mxu0 0
          %769 = vmatprep.subr.bf16.mxu0 0
          %770 = vmatpush2.bf16.msra.mxu0 0
          %771 = vmatprep.subr.bf16.mxu0 0
          %772 = vmatpush2.bf16.msra.mxu0 0
          %773 = vmatprep.subr.bf16.mxu0 0
          %774 = vmatpush2.bf16.msra.mxu0 0
          %775 = vmatprep.subr.bf16.mxu0 0
          %776 = vmatpush2.bf16.msra.mxu0 0
          %777 = vmatprep.subr.bf16.mxu0 0
          %778 = vmatpush2.bf16.msra.mxu0 0
          %779 = vmatprep.subr.bf16.mxu0 0
          %780 = vmatpush2.bf16.msra.mxu0 0
          %781 = vmatprep.mubr.bf16.mxu0 0
          %782 = vmatmul.mubr.bf16.gmra.mxu0 %v690
          %v783 = vpop.f32.mrf.mxu0
          %v784 = vadd.f32 0.0, %v783
          %v785 = vpop.f32.mrf.mxu0
          %v786 = vpop.f32.mrf.mxu0
          %v787 = vadd.f32 0.0, %v786
          %v788 = vpop.f32.mrf.mxu0
          %789 = vdwg.mxu0
          %v790 = vpack.c.bf16 %v730, %v727
          %v792 = vunpack.c.l.b16 %v790
          %v793 = vunpack.c.h.b16 %v790
          %v794 = vpack.c.b16 %v792, %v792
          %v795 = vpack.c.b16 %v793, %v793
          %vm798 = vcmask 125952
          %799 = vst.msk [vmem:[#allocation2] sm:$0xf] %vm798, %v794
          %800 = vst.msk [vmem:[#allocation2 + $0x4] sm:$0xf] %vm798, %v795
          %v801 = vpack.c.bf16 %v787, %v784
          %v803 = vunpack.c.l.b16 %v801
          %v804 = vunpack.c.h.b16 %v801
          %v805 = vpack.c.b16 %v803, %v803
          %v806 = vpack.c.b16 %v804, %v804
          %809 = vst.msk [vmem:[#allocation3] sm:$0xf] %vm798, %v805
          %810 = vst.msk [vmem:[#allocation3 + $0x4] sm:$0xf] %vm798, %v806
          %811 = vrot.lane.b32.xlu0 %v794, 112
          %v812 = vpop.permute.xlu0 %811
          %813 = vrot.lane.b32.xlu0 %v795, 112
          %v814 = vpop.permute.xlu0 %813
          %s817 = scalar_lea.vmem [#allocation2], 8
          %818 = vst.msk [vmem:[%s817] sm:$0xf] %vm798, %v812
          %819 = vst.msk [vmem:[%s817 + $0x4] sm:$0xf] %vm798, %v814
          %820 = vrot.lane.b32.xlu0 %v805, 112
          %v821 = vpop.permute.xlu0 %820
          %822 = vrot.lane.b32.xlu0 %v806, 112
          %v823 = vpop.permute.xlu0 %822
          %s826 = scalar_lea.vmem [#allocation3], 8
          %827 = vst.msk [vmem:[%s826] sm:$0xf] %vm798, %v821
          %828 = vst.msk [vmem:[%s826 + $0x4] sm:$0xf] %vm798, %v823
          %829 = vrot.lane.b32.xlu0 %v794, 96
          %v830 = vpop.permute.xlu0 %829
          %831 = vrot.lane.b32.xlu0 %v795, 96
          %v832 = vpop.permute.xlu0 %831
          %s835 = scalar_lea.vmem [#allocation2], 16
          %836 = vst.msk [vmem:[%s835] sm:$0xf] %vm798, %v830
          %837 = vst.msk [vmem:[%s835 + $0x4] sm:$0xf] %vm798, %v832
          %838 = vrot.lane.b32.xlu0 %v805, 96
          %v839 = vpop.permute.xlu0 %838
          %840 = vrot.lane.b32.xlu0 %v806, 96
          %v841 = vpop.permute.xlu0 %840
          %s844 = scalar_lea.vmem [#allocation3], 16
          %845 = vst.msk [vmem:[%s844] sm:$0xf] %vm798, %v839
          %846 = vst.msk [vmem:[%s844 + $0x4] sm:$0xf] %vm798, %v841
          %847 = vrot.lane.b32.xlu0 %v794, 80
          %v848 = vpop.permute.xlu0 %847
          %849 = vrot.lane.b32.xlu0 %v795, 80
          %v850 = vpop.permute.xlu0 %849
          %s853 = scalar_lea.vmem [#allocation2], 24
          %854 = vst.msk [vmem:[%s853] sm:$0xf] %vm798, %v848
          %855 = vst.msk [vmem:[%s853 + $0x4] sm:$0xf] %vm798, %v850
          %856 = vrot.lane.b32.xlu0 %v805, 80
          %v857 = vpop.permute.xlu0 %856
          %858 = vrot.lane.b32.xlu0 %v806, 80
          %v859 = vpop.permute.xlu0 %858
          %s862 = scalar_lea.vmem [#allocation3], 24
          %863 = vst.msk [vmem:[%s862] sm:$0xf] %vm798, %v857
          %864 = vst.msk [vmem:[%s862 + $0x4] sm:$0xf] %vm798, %v859
        $region108: #{tpu_custom_call.1} parent=83 // pred_fallthru
          _
        %v865 = vld [vmem:[%s659] sm:$0xff]
        %v866 = vpack.c.bf16 %v865, %v865
        %v867 = vld [vmem:[#allocation7] sm:$0xf]
        %v868 = vld [vmem:[#allocation7 + $0x4] sm:$0xf]
        %v869 = vld [vmem:[#allocation7 + $0x8] sm:$0xf]
        %v870 = vld [vmem:[#allocation7 + $0xc] sm:$0xf]
        %v875 = vunpack.c.l.b16 %v867
        %v876 = vunpack.c.l.b16 %v868
        %v877 = vunpack.c.l.b16 %v869
        %v878 = vunpack.c.l.b16 %v870
        %v879 = vpack.c.b16 %v876, %v875
        %v880 = vpack.c.b16 %v878, %v877
        %vm883 = vcmask 261120
        %v885 = vsel %vm883, %v866, 0
        %887 = vmatprep.subr.bf16.mxu0 0
        %888 = vmatpush1.bf16.msra.mxu0 0
        %889 = vmatprep.subr.bf16.mxu0 0
        %890 = vmatpush1.bf16.msra.mxu0 0
        %891 = vmatprep.subr.bf16.mxu0 0
        %892 = vmatpush1.bf16.msra.mxu0 0
        %893 = vmatprep.subr.bf16.mxu0 0
        %894 = vmatpush1.bf16.msra.mxu0 0
        %895 = vmatprep.subr.bf16.mxu0 0
        %896 = vmatpush1.bf16.msra.mxu0 0
        %897 = vmatprep.subr.bf16.mxu0 0
        %898 = vmatpush1.bf16.msra.mxu0 0
        %899 = vmatprep.subr.bf16.mxu0 0
        %900 = vmatpush1.bf16.msra.mxu0 %v880
        %901 = vmatprep.subr.bf16.mxu0 0
        %902 = vmatpush1.bf16.msra.mxu0 %v879
        %903 = vmatprep.subr.bf16.mxu0 0
        %904 = vmatpush2.bf16.msra.mxu0 0
        %905 = vmatprep.subr.bf16.mxu0 0
        %906 = vmatpush2.bf16.msra.mxu0 0
        %907 = vmatprep.subr.bf16.mxu0 0
        %908 = vmatpush2.bf16.msra.mxu0 0
        %909 = vmatprep.subr.bf16.mxu0 0
        %910 = vmatpush2.bf16.msra.mxu0 0
        %911 = vmatprep.subr.bf16.mxu0 0
        %912 = vmatpush2.bf16.msra.mxu0 0
        %913 = vmatprep.subr.bf16.mxu0 0
        %914 = vmatpush2.bf16.msra.mxu0 0
        %915 = vmatprep.subr.bf16.mxu0 0
        %916 = vmatpush2.bf16.msra.mxu0 0
        %917 = vmatprep.subr.bf16.mxu0 0
        %918 = vmatpush2.bf16.msra.mxu0 0
        %919 = vmatprep.mubr.bf16.mxu0 0
        %920 = vmatmul.mubr.bf16.gmra.mxu0 %v885
        %v921 = vpop.f32.mrf.mxu0
        %v922 = vadd.f32 0.0, %v921
        %v923 = vpop.f32.mrf.mxu0
        %v924 = vpop.f32.mrf.mxu0
        %v925 = vpop.f32.mrf.mxu0
        %926 = vdwg.mxu0
        %v927 = vmul.f32 %v922, 0.0625
        %929 = vrot.lane.b32.xlu0 %v927, 112
        %v930 = vpop.permute.xlu0 %929
        %932 = vrot.lane.b32.xlu0 %v927, 96
        %v933 = vpop.permute.xlu0 %932
        %935 = vrot.lane.b32.xlu0 %v927, 80
        %v936 = vpop.permute.xlu0 %935
        %v938 = vpack.c.bf16 %v927, %v927
        %v939 = vpack.c.bf16 %v930, %v930
        %v940 = vpack.c.bf16 %v933, %v933
        %v941 = vpack.c.bf16 %v936, %v936
        %v942 = vld [vmem:[#allocation2] sm:$0xf]
        %v943 = vld [vmem:[#allocation2 + $0x4] sm:$0xf]
        %v944 = vld [vmem:[#allocation2 + $0x8] sm:$0xf]
        %v945 = vld [vmem:[#allocation2 + $0xc] sm:$0xf]
        %v946 = vld [vmem:[#allocation2 + $0x10] sm:$0xf]
        %v947 = vld [vmem:[#allocation2 + $0x14] sm:$0xf]
        %v948 = vld [vmem:[#allocation2 + $0x18] sm:$0xf]
        %v949 = vld [vmem:[#allocation2 + $0x1c] sm:$0xf]
        %v950 = vld [vmem:[%s651] sm:$0xff]
        %v953 = vunpack.c.l.b16 %v942
        %v954 = vunpack.c.l.b16 %v943
        %v955 = vpack.c.b16 %v954, %v953
        %vm956 = vcmask 130048
        %v958 = vsel %vm956, %v938, 0
        %v961 = vsel %vm956, %v955, 0
        %963 = vmatprep.subr.bf16.mxu0 0
        %964 = vmatpush1.bf16.xpose.msra.mxu0 0
        %965 = vmatprep.subr.bf16.mxu0 0
        %966 = vmatpush1.bf16.xpose.msra.mxu0 0
        %967 = vmatprep.subr.bf16.mxu0 0
        %968 = vmatpush1.bf16.xpose.msra.mxu0 0
        %969 = vmatprep.subr.bf16.mxu0 0
        %970 = vmatpush1.bf16.xpose.msra.mxu0 0
        %971 = vmatprep.subr.bf16.mxu0 0
        %972 = vmatpush1.bf16.xpose.msra.mxu0 0
        %973 = vmatprep.subr.bf16.mxu0 0
        %974 = vmatpush1.bf16.xpose.msra.mxu0 0
        %975 = vmatprep.subr.bf16.mxu0 0
        %976 = vmatpush1.bf16.xpose.msra.mxu0 0
        %977 = vmatprep.subr.bf16.mxu0 0
        %978 = vmatpush1.bf16.xpose.msra.mxu0 %v961
        %979 = vmatprep.subr.bf16.mxu0 0
        %980 = vmatpush2.bf16.xpose.msra.mxu0 0
        %981 = vmatprep.subr.bf16.mxu0 0
        %982 = vmatpush2.bf16.xpose.msra.mxu0 0
        %983 = vmatprep.subr.bf16.mxu0 0
        %984 = vmatpush2.bf16.xpose.msra.mxu0 0
        %985 = vmatprep.subr.bf16.mxu0 0
        %986 = vmatpush2.bf16.xpose.msra.mxu0 0
        %987 = vmatprep.subr.bf16.mxu0 0
        %988 = vmatpush2.bf16.xpose.msra.mxu0 0
        %989 = vmatprep.subr.bf16.mxu0 0
        %990 = vmatpush2.bf16.xpose.msra.mxu0 0
        %991 = vmatprep.subr.bf16.mxu0 0
        %992 = vmatpush2.bf16.xpose.msra.mxu0 0
        %993 = vmatprep.subr.bf16.mxu0 0
        %994 = vmatpush2.bf16.xpose.msra.mxu0 0
        %995 = vmatprep.mubr.bf16.mxu0 0
        %996 = vmatmul.mubr.bf16.gmra.mxu0 %v958
        %v997 = vpop.f32.mrf.mxu0
        %v998 = vadd.f32 %v950, %v997
        %v999 = vpop.f32.mrf.mxu0
        %v1000 = vpop.f32.mrf.mxu0
        %v1001 = vpop.f32.mrf.mxu0
        %1002 = vdwg.mxu0
        %v1005 = vunpack.c.l.b16 %v944
        %v1006 = vunpack.c.l.b16 %v945
        %v1007 = vpack.c.b16 %v1006, %v1005
        %v1009 = vsel %vm956, %v939, 0
        %v1012 = vsel %vm956, %v1007, 0
        %1014 = vmatprep.subr.bf16.mxu0 0
        %1015 = vmatpush1.bf16.xpose.msra.mxu0 0
        %1016 = vmatprep.subr.bf16.mxu0 0
        %1017 = vmatpush1.bf16.xpose.msra.mxu0 0
        %1018 = vmatprep.subr.bf16.mxu0 0
        %1019 = vmatpush1.bf16.xpose.msra.mxu0 0
        %1020 = vmatprep.subr.bf16.mxu0 0
        %1021 = vmatpush1.bf16.xpose.msra.mxu0 0
        %1022 = vmatprep.subr.bf16.mxu0 0
        %1023 = vmatpush1.bf16.xpose.msra.mxu0 0
        %1024 = vmatprep.subr.bf16.mxu0 0
        %1025 = vmatpush1.bf16.xpose.msra.mxu0 0
        %1026 = vmatprep.subr.bf16.mxu0 0
        %1027 = vmatpush1.bf16.xpose.msra.mxu0 0
        %1028 = vmatprep.subr.bf16.mxu0 0
        %1029 = vmatpush1.bf16.xpose.msra.mxu0 %v1012
        %1030 = vmatprep.subr.bf16.mxu0 0
        %1031 = vmatpush2.bf16.xpose.msra.mxu0 0
        %1032 = vmatprep.subr.bf16.mxu0 0
        %1033 = vmatpush2.bf16.xpose.msra.mxu0 0
        %1034 = vmatprep.subr.bf16.mxu0 0
        %1035 = vmatpush2.bf16.xpose.msra.mxu0 0
        %1036 = vmatprep.subr.bf16.mxu0 0
        %1037 = vmatpush2.bf16.xpose.msra.mxu0 0
        %1038 = vmatprep.subr.bf16.mxu0 0
        %1039 = vmatpush2.bf16.xpose.msra.mxu0 0
        %1040 = vmatprep.subr.bf16.mxu0 0
        %1041 = vmatpush2.bf16.xpose.msra.mxu0 0
        %1042 = vmatprep.subr.bf16.mxu0 0
        %1043 = vmatpush2.bf16.xpose.msra.mxu0 0
        %1044 = vmatprep.subr.bf16.mxu0 0
        %1045 = vmatpush2.bf16.xpose.msra.mxu0 0
        %1046 = vmatprep.mubr.bf16.mxu0 0
        %1047 = vmatmul.mubr.bf16.gmra.mxu0 %v1009
        %v1048 = vpop.f32.mrf.mxu0
        %v1049 = vadd.f32 %v950, %v1048
        %v1050 = vpop.f32.mrf.mxu0
        %v1051 = vpop.f32.mrf.mxu0
        %v1052 = vpop.f32.mrf.mxu0
        %1053 = vdwg.mxu0
        %v1056 = vunpack.c.l.b16 %v946
        %v1057 = vunpack.c.l.b16 %v947
        %v1058 = vpack.c.b16 %v1057, %v1056
        %v1060 = vsel %vm956, %v940, 0
        %v1063 = vsel %vm956, %v1058, 0
        %1065 = vmatprep.subr.bf16.mxu0 0
        %1066 = vmatpush1.bf16.xpose.msra.mxu0 0
        %1067 = vmatprep.subr.bf16.mxu0 0
        %1068 = vmatpush1.bf16.xpose.msra.mxu0 0
        %1069 = vmatprep.subr.bf16.mxu0 0
        %1070 = vmatpush1.bf16.xpose.msra.mxu0 0
        %1071 = vmatprep.subr.bf16.mxu0 0
        %1072 = vmatpush1.bf16.xpose.msra.mxu0 0
        %1073 = vmatprep.subr.bf16.mxu0 0
        %1074 = vmatpush1.bf16.xpose.msra.mxu0 0
        %1075 = vmatprep.subr.bf16.mxu0 0
        %1076 = vmatpush1.bf16.xpose.msra.mxu0 0
        %1077 = vmatprep.subr.bf16.mxu0 0
        %1078 = vmatpush1.bf16.xpose.msra.mxu0 0
        %1079 = vmatprep.subr.bf16.mxu0 0
        %1080 = vmatpush1.bf16.xpose.msra.mxu0 %v1063
        %1081 = vmatprep.subr.bf16.mxu0 0
        %1082 = vmatpush2.bf16.xpose.msra.mxu0 0
        %1083 = vmatprep.subr.bf16.mxu0 0
        %1084 = vmatpush2.bf16.xpose.msra.mxu0 0
        %1085 = vmatprep.subr.bf16.mxu0 0
        %1086 = vmatpush2.bf16.xpose.msra.mxu0 0
        %1087 = vmatprep.subr.bf16.mxu0 0
        %1088 = vmatpush2.bf16.xpose.msra.mxu0 0
        %1089 = vmatprep.subr.bf16.mxu0 0
        %1090 = vmatpush2.bf16.xpose.msra.mxu0 0
        %1091 = vmatprep.subr.bf16.mxu0 0
        %1092 = vmatpush2.bf16.xpose.msra.mxu0 0
        %1093 = vmatprep.subr.bf16.mxu0 0
        %1094 = vmatpush2.bf16.xpose.msra.mxu0 0
        %1095 = vmatprep.subr.bf16.mxu0 0
        %1096 = vmatpush2.bf16.xpose.msra.mxu0 0
        %1097 = vmatprep.mubr.bf16.mxu0 0
        %1098 = vmatmul.mubr.bf16.gmra.mxu0 %v1060
        %v1099 = vpop.f32.mrf.mxu0
        %v1100 = vadd.f32 %v950, %v1099
        %v1101 = vpop.f32.mrf.mxu0
        %v1102 = vpop.f32.mrf.mxu0
        %v1103 = vpop.f32.mrf.mxu0
        %1104 = vdwg.mxu0
        %v1107 = vunpack.c.l.b16 %v948
        %v1108 = vunpack.c.l.b16 %v949
        %v1109 = vpack.c.b16 %v1108, %v1107
        %v1111 = vsel %vm956, %v941, 0
        %v1114 = vsel %vm956, %v1109, 0
        %1116 = vmatprep.subr.bf16.mxu0 0
        %1117 = vmatpush1.bf16.xpose.msra.mxu0 0
        %1118 = vmatprep.subr.bf16.mxu0 0
        %1119 = vmatpush1.bf16.xpose.msra.mxu0 0
        %1120 = vmatprep.subr.bf16.mxu0 0
        %1121 = vmatpush1.bf16.xpose.msra.mxu0 0
        %1122 = vmatprep.subr.bf16.mxu0 0
        %1123 = vmatpush1.bf16.xpose.msra.mxu0 0
        %1124 = vmatprep.subr.bf16.mxu0 0
        %1125 = vmatpush1.bf16.xpose.msra.mxu0 0
        %1126 = vmatprep.subr.bf16.mxu0 0
        %1127 = vmatpush1.bf16.xpose.msra.mxu0 0
        %1128 = vmatprep.subr.bf16.mxu0 0
        %1129 = vmatpush1.bf16.xpose.msra.mxu0 0
        %1130 = vmatprep.subr.bf16.mxu0 0
        %1131 = vmatpush1.bf16.xpose.msra.mxu0 %v1114
        %1132 = vmatprep.subr.bf16.mxu0 0
        %1133 = vmatpush2.bf16.xpose.msra.mxu0 0
        %1134 = vmatprep.subr.bf16.mxu0 0
        %1135 = vmatpush2.bf16.xpose.msra.mxu0 0
        %1136 = vmatprep.subr.bf16.mxu0 0
        %1137 = vmatpush2.bf16.xpose.msra.mxu0 0
        %1138 = vmatprep.subr.bf16.mxu0 0
        %1139 = vmatpush2.bf16.xpose.msra.mxu0 0
        %1140 = vmatprep.subr.bf16.mxu0 0
        %1141 = vmatpush2.bf16.xpose.msra.mxu0 0
        %1142 = vmatprep.subr.bf16.mxu0 0
        %1143 = vmatpush2.bf16.xpose.msra.mxu0 0
        %1144 = vmatprep.subr.bf16.mxu0 0
        %1145 = vmatpush2.bf16.xpose.msra.mxu0 0
        %1146 = vmatprep.subr.bf16.mxu0 0
        %1147 = vmatpush2.bf16.xpose.msra.mxu0 0
        %1148 = vmatprep.mubr.bf16.mxu0 0
        %1149 = vmatmul.mubr.bf16.gmra.mxu0 %v1111
        %v1150 = vpop.f32.mrf.mxu0
        %v1151 = vadd.f32 %v950, %v1150
        %v1152 = vpop.f32.mrf.mxu0
        %v1153 = vpop.f32.mrf.mxu0
        %v1154 = vpop.f32.mrf.mxu0
        %1155 = vdwg.mxu0
        %v1156 = vsel %vm956, %v998, -inf
        %1157 = vmax.xlane.f32.xlu0 %v1156
        %v1158 = vpop.xlane.xlu0 %1157
        %v1159 = vsel %vm956, %v1049, -inf
        %1160 = vmax.xlane.f32.xlu0 %v1159
        %v1161 = vpop.xlane.xlu0 %1160
        %v1162 = vsel %vm956, %v1100, -inf
        %1163 = vmax.xlane.f32.xlu0 %v1162
        %v1164 = vpop.xlane.xlu0 %1163
        %v1165 = vsel %vm956, %v1151, -inf
        %1166 = vmax.xlane.f32.xlu0 %v1165
        %v1167 = vpop.xlane.xlu0 %1166
        %v1168 = vsub.f32 %v998, %v1158
        %v1169 = vsub.f32 %v1049, %v1161
        %v1170 = vsub.f32 %v1100, %v1164
        %v1171 = vsub.f32 %v1151, %v1167
        %v1172 = vmul.f32 %v1168, 1.442695
        %v1173 = vpow.pop %v1172
        %v1174 = vmul.f32 %v1169, 1.442695
        %v1175 = vpow.pop %v1174
        %v1176 = vmul.f32 %v1170, 1.442695
        %v1177 = vpow.pop %v1176
        %v1178 = vmul.f32 %v1171, 1.442695
        %v1179 = vpow.pop %v1178
        %v1180 = vsel %vm956, %v1173, 0.0
        %1181 = vadd.xlane.f32.xlu0 %v1180
        %v1182 = vpop.xlane.xlu0 %1181
        %v1183 = vsel %vm956, %v1175, 0.0
        %1184 = vadd.xlane.f32.xlu0 %v1183
        %v1185 = vpop.xlane.xlu0 %1184
        %v1186 = vsel %vm956, %v1177, 0.0
        %1187 = vadd.xlane.f32.xlu0 %v1186
        %v1188 = vpop.xlane.xlu0 %1187
        %v1189 = vsel %vm956, %v1179, 0.0
        %1190 = vadd.xlane.f32.xlu0 %v1189
        %v1191 = vpop.xlane.xlu0 %1190
        %v1192 = vrcp.pop %v1182
        %v1193 = vrcp.pop %v1185
        %v1194 = vrcp.pop %v1188
        %v1195 = vrcp.pop %v1191
        %v1196 = vmul.f32 %v1173, %v1192
        %v1197 = vmul.f32 %v1175, %v1193
        %v1198 = vmul.f32 %v1177, %v1194
        %v1199 = vmul.f32 %v1179, %v1195
        %v1200 = vpack.c.bf16 %v1196, %v1196
        %v1201 = vpack.c.bf16 %v1197, %v1197
        %v1202 = vpack.c.bf16 %v1198, %v1198
        %v1203 = vpack.c.bf16 %v1199, %v1199
        %v1204 = vld [vmem:[#allocation3] sm:$0xf]
        %v1205 = vld [vmem:[#allocation3 + $0x4] sm:$0xf]
        %v1206 = vld [vmem:[#allocation3 + $0x8] sm:$0xf]
        %v1207 = vld [vmem:[#allocation3 + $0xc] sm:$0xf]
        %v1208 = vld [vmem:[#allocation3 + $0x10] sm:$0xf]
        %v1209 = vld [vmem:[#allocation3 + $0x14] sm:$0xf]
        %v1210 = vld [vmem:[#allocation3 + $0x18] sm:$0xf]
        %v1211 = vld [vmem:[#allocation3 + $0x1c] sm:$0xf]
        %v1214 = vunpack.c.l.b16 %v1204
        %v1215 = vunpack.c.l.b16 %v1205
        %v1216 = vpack.c.b16 %v1215, %v1214
        %v1219 = vsel %vm956, %v1200, 0
        %1221 = vmatprep.subr.bf16.mxu0 0
        %1222 = vmatpush1.bf16.msra.mxu0 0
        %1223 = vmatprep.subr.bf16.mxu0 0
        %1224 = vmatpush1.bf16.msra.mxu0 0
        %1225 = vmatprep.subr.bf16.mxu0 0
        %1226 = vmatpush1.bf16.msra.mxu0 0
        %1227 = vmatprep.subr.bf16.mxu0 0
        %1228 = vmatpush1.bf16.msra.mxu0 0
        %1229 = vmatprep.subr.bf16.mxu0 0
        %1230 = vmatpush1.bf16.msra.mxu0 0
        %1231 = vmatprep.subr.bf16.mxu0 0
        %1232 = vmatpush1.bf16.msra.mxu0 0
        %1233 = vmatprep.subr.bf16.mxu0 0
        %1234 = vmatpush1.bf16.msra.mxu0 0
        %1235 = vmatprep.subr.bf16.mxu0 0
        %1236 = vmatpush1.bf16.msra.mxu0 %v1216
        %1237 = vmatprep.subr.bf16.mxu0 0
        %1238 = vmatpush2.bf16.msra.mxu0 0
        %1239 = vmatprep.subr.bf16.mxu0 0
        %1240 = vmatpush2.bf16.msra.mxu0 0
        %1241 = vmatprep.subr.bf16.mxu0 0
        %1242 = vmatpush2.bf16.msra.mxu0 0
        %1243 = vmatprep.subr.bf16.mxu0 0
        %1244 = vmatpush2.bf16.msra.mxu0 0
        %1245 = vmatprep.subr.bf16.mxu0 0
        %1246 = vmatpush2.bf16.msra.mxu0 0
        %1247 = vmatprep.subr.bf16.mxu0 0
        %1248 = vmatpush2.bf16.msra.mxu0 0
        %1249 = vmatprep.subr.bf16.mxu0 0
        %1250 = vmatpush2.bf16.msra.mxu0 0
        %1251 = vmatprep.subr.bf16.mxu0 0
        %1252 = vmatpush2.bf16.msra.mxu0 0
        %1253 = vmatprep.mubr.bf16.mxu0 0
        %1254 = vmatmul.mubr.bf16.gmra.mxu0 %v1219
        %v1255 = vpop.f32.mrf.mxu0
        %v1256 = vadd.f32 0.0, %v1255
        %v1257 = vpop.f32.mrf.mxu0
        %v1258 = vpop.f32.mrf.mxu0
        %v1259 = vpop.f32.mrf.mxu0
        %1260 = vdwg.mxu0
        %v1263 = vunpack.c.l.b16 %v1206
        %v1264 = vunpack.c.l.b16 %v1207
        %v1265 = vpack.c.b16 %v1264, %v1263
        %v1268 = vsel %vm956, %v1201, 0
        %1270 = vmatprep.subr.bf16.mxu0 0
        %1271 = vmatpush1.bf16.msra.mxu0 0
        %1272 = vmatprep.subr.bf16.mxu0 0
        %1273 = vmatpush1.bf16.msra.mxu0 0
        %1274 = vmatprep.subr.bf16.mxu0 0
        %1275 = vmatpush1.bf16.msra.mxu0 0
        %1276 = vmatprep.subr.bf16.mxu0 0
        %1277 = vmatpush1.bf16.msra.mxu0 0
        %1278 = vmatprep.subr.bf16.mxu0 0
        %1279 = vmatpush1.bf16.msra.mxu0 0
        %1280 = vmatprep.subr.bf16.mxu0 0
        %1281 = vmatpush1.bf16.msra.mxu0 0
        %1282 = vmatprep.subr.bf16.mxu0 0
        %1283 = vmatpush1.bf16.msra.mxu0 0
        %1284 = vmatprep.subr.bf16.mxu0 0
        %1285 = vmatpush1.bf16.msra.mxu0 %v1265
        %1286 = vmatprep.subr.bf16.mxu0 0
        %1287 = vmatpush2.bf16.msra.mxu0 0
        %1288 = vmatprep.subr.bf16.mxu0 0
        %1289 = vmatpush2.bf16.msra.mxu0 0
        %1290 = vmatprep.subr.bf16.mxu0 0
        %1291 = vmatpush2.bf16.msra.mxu0 0
        %1292 = vmatprep.subr.bf16.mxu0 0
        %1293 = vmatpush2.bf16.msra.mxu0 0
        %1294 = vmatprep.subr.bf16.mxu0 0
        %1295 = vmatpush2.bf16.msra.mxu0 0
        %1296 = vmatprep.subr.bf16.mxu0 0
        %1297 = vmatpush2.bf16.msra.mxu0 0
        %1298 = vmatprep.subr.bf16.mxu0 0
        %1299 = vmatpush2.bf16.msra.mxu0 0
        %1300 = vmatprep.subr.bf16.mxu0 0
        %1301 = vmatpush2.bf16.msra.mxu0 0
        %1302 = vmatprep.mubr.bf16.mxu0 0
        %1303 = vmatmul.mubr.bf16.gmra.mxu0 %v1268
        %v1304 = vpop.f32.mrf.mxu0
        %v1305 = vadd.f32 0.0, %v1304
        %v1306 = vpop.f32.mrf.mxu0
        %v1307 = vpop.f32.mrf.mxu0
        %v1308 = vpop.f32.mrf.mxu0
        %1309 = vdwg.mxu0
        %v1312 = vunpack.c.l.b16 %v1208
        %v1313 = vunpack.c.l.b16 %v1209
        %v1314 = vpack.c.b16 %v1313, %v1312
        %v1317 = vsel %vm956, %v1202, 0
        %1319 = vmatprep.subr.bf16.mxu0 0
        %1320 = vmatpush1.bf16.msra.mxu0 0
        %1321 = vmatprep.subr.bf16.mxu0 0
        %1322 = vmatpush1.bf16.msra.mxu0 0
        %1323 = vmatprep.subr.bf16.mxu0 0
        %1324 = vmatpush1.bf16.msra.mxu0 0
        %1325 = vmatprep.subr.bf16.mxu0 0
        %1326 = vmatpush1.bf16.msra.mxu0 0
        %1327 = vmatprep.subr.bf16.mxu0 0
        %1328 = vmatpush1.bf16.msra.mxu0 0
        %1329 = vmatprep.subr.bf16.mxu0 0
        %1330 = vmatpush1.bf16.msra.mxu0 0
        %1331 = vmatprep.subr.bf16.mxu0 0
        %1332 = vmatpush1.bf16.msra.mxu0 0
        %1333 = vmatprep.subr.bf16.mxu0 0
        %1334 = vmatpush1.bf16.msra.mxu0 %v1314
        %1335 = vmatprep.subr.bf16.mxu0 0
        %1336 = vmatpush2.bf16.msra.mxu0 0
        %1337 = vmatprep.subr.bf16.mxu0 0
        %1338 = vmatpush2.bf16.msra.mxu0 0
        %1339 = vmatprep.subr.bf16.mxu0 0
        %1340 = vmatpush2.bf16.msra.mxu0 0
        %1341 = vmatprep.subr.bf16.mxu0 0
        %1342 = vmatpush2.bf16.msra.mxu0 0
        %1343 = vmatprep.subr.bf16.mxu0 0
        %1344 = vmatpush2.bf16.msra.mxu0 0
        %1345 = vmatprep.subr.bf16.mxu0 0
        %1346 = vmatpush2.bf16.msra.mxu0 0
        %1347 = vmatprep.subr.bf16.mxu0 0
        %1348 = vmatpush2.bf16.msra.mxu0 0
        %1349 = vmatprep.subr.bf16.mxu0 0
        %1350 = vmatpush2.bf16.msra.mxu0 0
        %1351 = vmatprep.mubr.bf16.mxu0 0
        %1352 = vmatmul.mubr.bf16.gmra.mxu0 %v1317
        %v1353 = vpop.f32.mrf.mxu0
        %v1354 = vadd.f32 0.0, %v1353
        %v1355 = vpop.f32.mrf.mxu0
        %v1356 = vpop.f32.mrf.mxu0
        %v1357 = vpop.f32.mrf.mxu0
        %1358 = vdwg.mxu0
        %v1361 = vunpack.c.l.b16 %v1210
        %v1362 = vunpack.c.l.b16 %v1211
        %v1363 = vpack.c.b16 %v1362, %v1361
        %v1366 = vsel %vm956, %v1203, 0
        %1368 = vmatprep.subr.bf16.mxu0 0
        %1369 = vmatpush1.bf16.msra.mxu0 0
        %1370 = vmatprep.subr.bf16.mxu0 0
        %1371 = vmatpush1.bf16.msra.mxu0 0
        %1372 = vmatprep.subr.bf16.mxu0 0
        %1373 = vmatpush1.bf16.msra.mxu0 0
        %1374 = vmatprep.subr.bf16.mxu0 0
        %1375 = vmatpush1.bf16.msra.mxu0 0
        %1376 = vmatprep.subr.bf16.mxu0 0
        %1377 = vmatpush1.bf16.msra.mxu0 0
        %1378 = vmatprep.subr.bf16.mxu0 0
        %1379 = vmatpush1.bf16.msra.mxu0 0
        %1380 = vmatprep.subr.bf16.mxu0 0
        %1381 = vmatpush1.bf16.msra.mxu0 0
        %1382 = vmatprep.subr.bf16.mxu0 0
        %1383 = vmatpush1.bf16.msra.mxu0 %v1363
        %1384 = vmatprep.subr.bf16.mxu0 0
        %1385 = vmatpush2.bf16.msra.mxu0 0
        %1386 = vmatprep.subr.bf16.mxu0 0
        %1387 = vmatpush2.bf16.msra.mxu0 0
        %1388 = vmatprep.subr.bf16.mxu0 0
        %1389 = vmatpush2.bf16.msra.mxu0 0
        %1390 = vmatprep.subr.bf16.mxu0 0
        %1391 = vmatpush2.bf16.msra.mxu0 0
        %1392 = vmatprep.subr.bf16.mxu0 0
        %1393 = vmatpush2.bf16.msra.mxu0 0
        %1394 = vmatprep.subr.bf16.mxu0 0
        %1395 = vmatpush2.bf16.msra.mxu0 0
        %1396 = vmatprep.subr.bf16.mxu0 0
        %1397 = vmatpush2.bf16.msra.mxu0 0
        %1398 = vmatprep.subr.bf16.mxu0 0
        %1399 = vmatpush2.bf16.msra.mxu0 0
        %1400 = vmatprep.mubr.bf16.mxu0 0
        %1401 = vmatmul.mubr.bf16.gmra.mxu0 %v1366
        %v1402 = vpop.f32.mrf.mxu0
        %v1403 = vadd.f32 0.0, %v1402
        %v1404 = vpop.f32.mrf.mxu0
        %v1405 = vpop.f32.mrf.mxu0
        %v1406 = vpop.f32.mrf.mxu0
        %1407 = vdwg.mxu0
        %v1408 = vld [vmem:[%s7] sm:$0x1]
        %v1409 = vpack.c.bf16 %v1256, %v1256
        %v1410 = vld [vmem:[%s6] sm:$0xf]
        %v1411 = vld [vmem:[%s6 + $0x4] sm:$0xf]
        %v1414 = vunpack.c.l.b16 %v1410
        %v1415 = vunpack.c.l.b16 %v1411
        %v1416 = vpack.c.b16 %v1415, %v1414
        %v1419 = vsel %vm956, %v1409, 0
        %1421 = vmatprep.subr.bf16.mxu0 0
        %1422 = vmatpush1.bf16.msra.mxu0 0
        %1423 = vmatprep.subr.bf16.mxu0 0
        %1424 = vmatpush1.bf16.msra.mxu0 0
        %1425 = vmatprep.subr.bf16.mxu0 0
        %1426 = vmatpush1.bf16.msra.mxu0 0
        %1427 = vmatprep.subr.bf16.mxu0 0
        %1428 = vmatpush1.bf16.msra.mxu0 0
        %1429 = vmatprep.subr.bf16.mxu0 0
        %1430 = vmatpush1.bf16.msra.mxu0 0
        %1431 = vmatprep.subr.bf16.mxu0 0
        %1432 = vmatpush1.bf16.msra.mxu0 0
        %1433 = vmatprep.subr.bf16.mxu0 0
        %1434 = vmatpush1.bf16.msra.mxu0 0
        %1435 = vmatprep.subr.bf16.mxu0 0
        %1436 = vmatpush1.bf16.msra.mxu0 %v1416
        %1437 = vmatprep.subr.bf16.mxu0 0
        %1438 = vmatpush2.bf16.msra.mxu0 0
        %1439 = vmatprep.subr.bf16.mxu0 0
        %1440 = vmatpush2.bf16.msra.mxu0 0
        %1441 = vmatprep.subr.bf16.mxu0 0
        %1442 = vmatpush2.bf16.msra.mxu0 0
        %1443 = vmatprep.subr.bf16.mxu0 0
        %1444 = vmatpush2.bf16.msra.mxu0 0
        %1445 = vmatprep.subr.bf16.mxu0 0
        %1446 = vmatpush2.bf16.msra.mxu0 0
        %1447 = vmatprep.subr.bf16.mxu0 0
        %1448 = vmatpush2.bf16.msra.mxu0 0
        %1449 = vmatprep.subr.bf16.mxu0 0
        %1450 = vmatpush2.bf16.msra.mxu0 0
        %1451 = vmatprep.subr.bf16.mxu0 0
        %1452 = vmatpush2.bf16.msra.mxu0 0
        %1453 = vmatprep.mubr.bf16.mxu0 0
        %1454 = vmatmul.mubr.bf16.gmra.mxu0 %v1419
        %v1455 = vpop.f32.mrf.mxu0
        %v1456 = vadd.f32 0.0, %v1455
        %v1457 = vpop.f32.mrf.mxu0
        %v1458 = vpop.f32.mrf.mxu0
        %v1459 = vpop.f32.mrf.mxu0
        %1460 = vdwg.mxu0
        %v1462 = vlaneseq
        %v1463 = vshrl.u32 %v1462, 7
        %v1464 = vsub.s32 0, %v1463
        %v1465 = vrot.slane %v1408, %v1464
        %v1467 = vadd.f32 %v1465, %v1456
        %v1468 = vpack.c.bf16 %v1305, %v1305
        %s1469 = scalar_lea.vmem %s6, 8
        %v1470 = vld [vmem:[%s1469] sm:$0xf]
        %v1471 = vld [vmem:[%s1469 + $0x4] sm:$0xf]
        %v1474 = vunpack.c.l.b16 %v1470
        %v1475 = vunpack.c.l.b16 %v1471
        %v1476 = vpack.c.b16 %v1475, %v1474
        %v1479 = vsel %vm956, %v1468, 0
        %1481 = vmatprep.subr.bf16.mxu0 0
        %1482 = vmatpush1.bf16.msra.mxu0 0
        %1483 = vmatprep.subr.bf16.mxu0 0
        %1484 = vmatpush1.bf16.msra.mxu0 0
        %1485 = vmatprep.subr.bf16.mxu0 0
        %1486 = vmatpush1.bf16.msra.mxu0 0
        %1487 = vmatprep.subr.bf16.mxu0 0
        %1488 = vmatpush1.bf16.msra.mxu0 0
        %1489 = vmatprep.subr.bf16.mxu0 0
        %1490 = vmatpush1.bf16.msra.mxu0 0
        %1491 = vmatprep.subr.bf16.mxu0 0
        %1492 = vmatpush1.bf16.msra.mxu0 0
        %1493 = vmatprep.subr.bf16.mxu0 0
        %1494 = vmatpush1.bf16.msra.mxu0 0
        %1495 = vmatprep.subr.bf16.mxu0 0
        %1496 = vmatpush1.bf16.msra.mxu0 %v1476
        %1497 = vmatprep.subr.bf16.mxu0 0
        %1498 = vmatpush2.bf16.msra.mxu0 0
        %1499 = vmatprep.subr.bf16.mxu0 0
        %1500 = vmatpush2.bf16.msra.mxu0 0
        %1501 = vmatprep.subr.bf16.mxu0 0
        %1502 = vmatpush2.bf16.msra.mxu0 0
        %1503 = vmatprep.subr.bf16.mxu0 0
        %1504 = vmatpush2.bf16.msra.mxu0 0
        %1505 = vmatprep.subr.bf16.mxu0 0
        %1506 = vmatpush2.bf16.msra.mxu0 0
        %1507 = vmatprep.subr.bf16.mxu0 0
        %1508 = vmatpush2.bf16.msra.mxu0 0
        %1509 = vmatprep.subr.bf16.mxu0 0
        %1510 = vmatpush2.bf16.msra.mxu0 0
        %1511 = vmatprep.subr.bf16.mxu0 0
        %1512 = vmatpush2.bf16.msra.mxu0 0
        %1513 = vmatprep.mubr.bf16.mxu0 0
        %1514 = vmatmul.mubr.bf16.gmra.mxu0 %v1479
        %v1515 = vpop.f32.mrf.mxu0
        %v1516 = vadd.f32 0.0, %v1515
        %v1517 = vpop.f32.mrf.mxu0
        %v1518 = vpop.f32.mrf.mxu0
        %v1519 = vpop.f32.mrf.mxu0
        %1520 = vdwg.mxu0
        %v1521 = vadd.f32 %v1467, %v1516
        %v1522 = vpack.c.bf16 %v1354, %v1354
        %s1523 = scalar_lea.vmem %s6, 16
        %v1524 = vld [vmem:[%s1523] sm:$0xf]
        %v1525 = vld [vmem:[%s1523 + $0x4] sm:$0xf]
        %v1528 = vunpack.c.l.b16 %v1524
        %v1529 = vunpack.c.l.b16 %v1525
        %v1530 = vpack.c.b16 %v1529, %v1528
        %v1533 = vsel %vm956, %v1522, 0
        %1535 = vmatprep.subr.bf16.mxu0 0
        %1536 = vmatpush1.bf16.msra.mxu0 0
        %1537 = vmatprep.subr.bf16.mxu0 0
        %1538 = vmatpush1.bf16.msra.mxu0 0
        %1539 = vmatprep.subr.bf16.mxu0 0
        %1540 = vmatpush1.bf16.msra.mxu0 0
        %1541 = vmatprep.subr.bf16.mxu0 0
        %1542 = vmatpush1.bf16.msra.mxu0 0
        %1543 = vmatprep.subr.bf16.mxu0 0
        %1544 = vmatpush1.bf16.msra.mxu0 0
        %1545 = vmatprep.subr.bf16.mxu0 0
        %1546 = vmatpush1.bf16.msra.mxu0 0
        %1547 = vmatprep.subr.bf16.mxu0 0
        %1548 = vmatpush1.bf16.msra.mxu0 0
        %1549 = vmatprep.subr.bf16.mxu0 0
        %1550 = vmatpush1.bf16.msra.mxu0 %v1530
        %1551 = vmatprep.subr.bf16.mxu0 0
        %1552 = vmatpush2.bf16.msra.mxu0 0
        %1553 = vmatprep.subr.bf16.mxu0 0
        %1554 = vmatpush2.bf16.msra.mxu0 0
        %1555 = vmatprep.subr.bf16.mxu0 0
        %1556 = vmatpush2.bf16.msra.mxu0 0
        %1557 = vmatprep.subr.bf16.mxu0 0
        %1558 = vmatpush2.bf16.msra.mxu0 0
        %1559 = vmatprep.subr.bf16.mxu0 0
        %1560 = vmatpush2.bf16.msra.mxu0 0
        %1561 = vmatprep.subr.bf16.mxu0 0
        %1562 = vmatpush2.bf16.msra.mxu0 0
        %1563 = vmatprep.subr.bf16.mxu0 0
        %1564 = vmatpush2.bf16.msra.mxu0 0
        %1565 = vmatprep.subr.bf16.mxu0 0
        %1566 = vmatpush2.bf16.msra.mxu0 0
        %1567 = vmatprep.mubr.bf16.mxu0 0
        %1568 = vmatmul.mubr.bf16.gmra.mxu0 %v1533
        %v1569 = vpop.f32.mrf.mxu0
        %v1570 = vadd.f32 0.0, %v1569
        %v1571 = vpop.f32.mrf.mxu0
        %v1572 = vpop.f32.mrf.mxu0
        %v1573 = vpop.f32.mrf.mxu0
        %1574 = vdwg.mxu0
        %v1575 = vadd.f32 %v1521, %v1570
        %v1576 = vpack.c.bf16 %v1403, %v1403
        %s1577 = scalar_lea.vmem %s6, 24
        %v1578 = vld [vmem:[%s1577] sm:$0xf]
        %v1579 = vld [vmem:[%s1577 + $0x4] sm:$0xf]
        %v1582 = vunpack.c.l.b16 %v1578
        %v1583 = vunpack.c.l.b16 %v1579
        %v1584 = vpack.c.b16 %v1583, %v1582
        %v1587 = vsel %vm956, %v1576, 0
        %1589 = vmatprep.subr.bf16.mxu0 0
        %1590 = vmatpush1.bf16.msra.mxu0 0
        %1591 = vmatprep.subr.bf16.mxu0 0
        %1592 = vmatpush1.bf16.msra.mxu0 0
        %1593 = vmatprep.subr.bf16.mxu0 0
        %1594 = vmatpush1.bf16.msra.mxu0 0
        %1595 = vmatprep.subr.bf16.mxu0 0
        %1596 = vmatpush1.bf16.msra.mxu0 0
        %1597 = vmatprep.subr.bf16.mxu0 0
        %1598 = vmatpush1.bf16.msra.mxu0 0
        %1599 = vmatprep.subr.bf16.mxu0 0
        %1600 = vmatpush1.bf16.msra.mxu0 0
        %1601 = vmatprep.subr.bf16.mxu0 0
        %1602 = vmatpush1.bf16.msra.mxu0 0
        %1603 = vmatprep.subr.bf16.mxu0 0
        %1604 = vmatpush1.bf16.msra.mxu0 %v1584
        %1605 = vmatprep.subr.bf16.mxu0 0
        %1606 = vmatpush2.bf16.msra.mxu0 0
        %1607 = vmatprep.subr.bf16.mxu0 0
        %1608 = vmatpush2.bf16.msra.mxu0 0
        %1609 = vmatprep.subr.bf16.mxu0 0
        %1610 = vmatpush2.bf16.msra.mxu0 0
        %1611 = vmatprep.subr.bf16.mxu0 0
        %1612 = vmatpush2.bf16.msra.mxu0 0
        %1613 = vmatprep.subr.bf16.mxu0 0
        %1614 = vmatpush2.bf16.msra.mxu0 0
        %1615 = vmatprep.subr.bf16.mxu0 0
        %1616 = vmatpush2.bf16.msra.mxu0 0
        %1617 = vmatprep.subr.bf16.mxu0 0
        %1618 = vmatpush2.bf16.msra.mxu0 0
        %1619 = vmatprep.subr.bf16.mxu0 0
        %1620 = vmatpush2.bf16.msra.mxu0 0
        %1621 = vmatprep.mubr.bf16.mxu0 0
        %1622 = vmatmul.mubr.bf16.gmra.mxu0 %v1587
        %v1623 = vpop.f32.mrf.mxu0
        %v1624 = vadd.f32 0.0, %v1623
        %v1625 = vpop.f32.mrf.mxu0
        %v1626 = vpop.f32.mrf.mxu0
        %v1627 = vpop.f32.mrf.mxu0
        %1628 = vdwg.mxu0
        %v1629 = vadd.f32 %v1575, %v1624
        %v1630 = vadd.f32 %v1629, %v865
        %v1631 = vld [vmem:[%s8] sm:$0x1]
        %v1632 = vld [vmem:[%s9] sm:$0x1]
        %v1633 = vsel %vm883, %v1630, 0.0
        %1634 = vadd.xlane.f32.xlu0 %v1633
        %v1635 = vpop.xlane.xlu0 %1634
        %v1636 = vrcp.pop 32.0
        %v1637 = vmul.f32 %v1635, %v1636
        %v1638 = vsub.f32 %v1630, %v1637
        %v1639 = vmul.f32 %v1638, %v1638
        %v1640 = vsel %vm883, %v1639, 0.0
        %1641 = vadd.xlane.f32.xlu0 %v1640
        %v1642 = vpop.xlane.xlu0 %1641
        %v1643 = vmul.f32 %v1642, %v1636
        %v1644 = vadd.f32 %v1643, 1e-05
        %v1645 = vrsqrt.pop %v1644
        %v1646 = vmul.f32 %v1638, %v1645
        %v1648 = vlaneseq
        %v1649 = vshrl.u32 %v1648, 7
        %v1650 = vsub.s32 0, %v1649
        %v1651 = vrot.slane %v1631, %v1650
        %v1653 = vmul.f32 %v1646, %v1651
        %v1655 = vlaneseq
        %v1656 = vshrl.u32 %v1655, 7
        %v1657 = vsub.s32 0, %v1656
        %v1658 = vrot.slane %v1632, %v1657
        %v1660 = vadd.f32 %v1653, %v1658
        %v1661 = vpack.c.bf16 %v1660, %v1660
        %v1662 = vld [vmem:[#allocation12] sm:$0xf]
        %v1663 = vld [vmem:[#allocation12 + $0x4] sm:$0xf]
        %v1664 = vld [vmem:[#allocation12 + $0x8] sm:$0xf]
        %v1665 = vld [vmem:[#allocation12 + $0xc] sm:$0xf]
        %v1666 = vld [vmem:[%s11] sm:$0x1]
        %v1668 = vlaneseq
        %v1669 = vshrl.u32 %v1668, 7
        %v1670 = vsub.s32 0, %v1669
        %v1671 = vrot.slane %v1666, %v1670
        %v1677 = vunpack.c.l.b16 %v1662
        %v1678 = vunpack.c.l.b16 %v1663
        %v1679 = vunpack.c.l.b16 %v1664
        %v1680 = vunpack.c.l.b16 %v1665
        %v1681 = vpack.c.b16 %v1678, %v1677
        %v1682 = vpack.c.b16 %v1680, %v1679
        %v1686 = vsel %vm883, %v1661, 0
        %1688 = vmatprep.subr.bf16.mxu0 0
        %1689 = vmatpush1.bf16.msra.mxu0 0
        %1690 = vmatprep.subr.bf16.mxu0 0
        %1691 = vmatpush1.bf16.msra.mxu0 0
        %1692 = vmatprep.subr.bf16.mxu0 0
        %1693 = vmatpush1.bf16.msra.mxu0 0
        %1694 = vmatprep.subr.bf16.mxu0 0
        %1695 = vmatpush1.bf16.msra.mxu0 0
        %1696 = vmatprep.subr.bf16.mxu0 0
        %1697 = vmatpush1.bf16.msra.mxu0 0
        %1698 = vmatprep.subr.bf16.mxu0 0
        %1699 = vmatpush1.bf16.msra.mxu0 0
        %1700 = vmatprep.subr.bf16.mxu0 0
        %1701 = vmatpush1.bf16.msra.mxu0 %v1682
        %1702 = vmatprep.subr.bf16.mxu0 0
        %1703 = vmatpush1.bf16.msra.mxu0 %v1681
        %1704 = vmatprep.subr.bf16.mxu0 0
        %1705 = vmatpush2.bf16.msra.mxu0 0
        %1706 = vmatprep.subr.bf16.mxu0 0
        %1707 = vmatpush2.bf16.msra.mxu0 0
        %1708 = vmatprep.subr.bf16.mxu0 0
        %1709 = vmatpush2.bf16.msra.mxu0 0
        %1710 = vmatprep.subr.bf16.mxu0 0
        %1711 = vmatpush2.bf16.msra.mxu0 0
        %1712 = vmatprep.subr.bf16.mxu0 0
        %1713 = vmatpush2.bf16.msra.mxu0 0
        %1714 = vmatprep.subr.bf16.mxu0 0
        %1715 = vmatpush2.bf16.msra.mxu0 0
        %1716 = vmatprep.subr.bf16.mxu0 0
        %1717 = vmatpush2.bf16.msra.mxu0 0
        %1718 = vmatprep.subr.bf16.mxu0 0
        %1719 = vmatpush2.bf16.msra.mxu0 0
        %1720 = vmatprep.mubr.bf16.mxu0 0
        %1721 = vmatmul.mubr.bf16.gmra.mxu0 %v1686
        %v1722 = vpop.f32.mrf.mxu0
        %v1723 = vadd.f32 %v1671, %v1722
        %v1724 = vpop.f32.mrf.mxu0
        %v1725 = vpop.f32.mrf.mxu0
        %v1726 = vpop.f32.mrf.mxu0
        %1727 = vdwg.mxu0
        %v1728 = vmax.f32 %v1723, 0.0
        %v1729 = vpack.c.bf16 %v1728, %v1728
        %v1730 = vld [vmem:[%s12] sm:$0xf]
        %v1731 = vld [vmem:[%s12 + $0x4] sm:$0xf]
        %v1732 = vld [vmem:[%s12 + $0x8] sm:$0xf]
        %v1733 = vld [vmem:[%s12 + $0xc] sm:$0xf]
        %v1734 = vld [vmem:[%s12 + $0x10] sm:$0xf]
        %v1735 = vld [vmem:[%s12 + $0x14] sm:$0xf]
        %v1736 = vld [vmem:[%s12 + $0x18] sm:$0xf]
        %v1737 = vld [vmem:[%s12 + $0x1c] sm:$0xf]
        %v1738 = vld [vmem:[%s12 + $0x20] sm:$0xf]
        %v1739 = vld [vmem:[%s12 + $0x24] sm:$0xf]
        %v1740 = vld [vmem:[%s12 + $0x28] sm:$0xf]
        %v1741 = vld [vmem:[%s12 + $0x2c] sm:$0xf]
        %v1742 = vld [vmem:[%s12 + $0x30] sm:$0xf]
        %v1743 = vld [vmem:[%s12 + $0x34] sm:$0xf]
        %v1744 = vld [vmem:[%s12 + $0x38] sm:$0xf]
        %v1745 = vld [vmem:[%s12 + $0x3c] sm:$0xf]
        %v1746 = vld [vmem:[%s13] sm:$0x1]
        %v1748 = vlaneseq
        %v1749 = vshrl.u32 %v1748, 7
        %v1750 = vsub.s32 0, %v1749
        %v1751 = vrot.slane %v1746, %v1750
        %v1769 = vunpack.c.l.b16 %v1730
        %v1770 = vunpack.c.l.b16 %v1731
        %v1771 = vunpack.c.l.b16 %v1732
        %v1772 = vunpack.c.l.b16 %v1733
        %v1773 = vunpack.c.l.b16 %v1734
        %v1774 = vunpack.c.l.b16 %v1735
        %v1775 = vunpack.c.l.b16 %v1736
        %v1776 = vunpack.c.l.b16 %v1737
        %v1777 = vunpack.c.l.b16 %v1738
        %v1778 = vunpack.c.l.b16 %v1739
        %v1779 = vunpack.c.l.b16 %v1740
        %v1780 = vunpack.c.l.b16 %v1741
        %v1781 = vunpack.c.l.b16 %v1742
        %v1782 = vunpack.c.l.b16 %v1743
        %v1783 = vunpack.c.l.b16 %v1744
        %v1784 = vunpack.c.l.b16 %v1745
        %v1785 = vpack.c.b16 %v1770, %v1769
        %v1786 = vpack.c.b16 %v1772, %v1771
        %v1787 = vpack.c.b16 %v1774, %v1773
        %v1788 = vpack.c.b16 %v1776, %v1775
        %v1789 = vpack.c.b16 %v1778, %v1777
        %v1790 = vpack.c.b16 %v1780, %v1779
        %v1791 = vpack.c.b16 %v1782, %v1781
        %v1792 = vpack.c.b16 %v1784, %v1783
        %1801 = vmatprep.subr.bf16.mxu0 0
        %1802 = vmatpush1.bf16.msra.mxu0 %v1792
        %1803 = vmatprep.subr.bf16.mxu0 0
        %1804 = vmatpush1.bf16.msra.mxu0 %v1791
        %1805 = vmatprep.subr.bf16.mxu0 0
        %1806 = vmatpush1.bf16.msra.mxu0 %v1790
        %1807 = vmatprep.subr.bf16.mxu0 0
        %1808 = vmatpush1.bf16.msra.mxu0 %v1789
        %1809 = vmatprep.subr.bf16.mxu0 0
        %1810 = vmatpush1.bf16.msra.mxu0 %v1788
        %1811 = vmatprep.subr.bf16.mxu0 0
        %1812 = vmatpush1.bf16.msra.mxu0 %v1787
        %1813 = vmatprep.subr.bf16.mxu0 0
        %1814 = vmatpush1.bf16.msra.mxu0 %v1786
        %1815 = vmatprep.subr.bf16.mxu0 0
        %1816 = vmatpush1.bf16.msra.mxu0 %v1785
        %1817 = vmatprep.subr.bf16.mxu0 0
        %1818 = vmatpush2.bf16.msra.mxu0 0
        %1819 = vmatprep.subr.bf16.mxu0 0
        %1820 = vmatpush2.bf16.msra.mxu0 0
        %1821 = vmatprep.subr.bf16.mxu0 0
        %1822 = vmatpush2.bf16.msra.mxu0 0
        %1823 = vmatprep.subr.bf16.mxu0 0
        %1824 = vmatpush2.bf16.msra.mxu0 0
        %1825 = vmatprep.subr.bf16.mxu0 0
        %1826 = vmatpush2.bf16.msra.mxu0 0
        %1827 = vmatprep.subr.bf16.mxu0 0
        %1828 = vmatpush2.bf16.msra.mxu0 0
        %1829 = vmatprep.subr.bf16.mxu0 0
        %1830 = vmatpush2.bf16.msra.mxu0 0
        %1831 = vmatprep.subr.bf16.mxu0 0
        %1832 = vmatpush2.bf16.msra.mxu0 0
        %1833 = vmatprep.mubr.bf16.mxu0 0
        %1834 = vmatmul.mubr.bf16.gmra.mxu0 %v1729
        %v1835 = vpop.f32.mrf.mxu0
        %v1836 = vadd.f32 %v1751, %v1835
        %v1837 = vpop.f32.mrf.mxu0
        %v1838 = vpop.f32.mrf.mxu0
        %v1839 = vpop.f32.mrf.mxu0
        %1840 = vdwg.mxu0
        %v1841 = vadd.f32 %v1836, %v1660
        %v1842 = vld [vmem:[%s14] sm:$0x1]
        %v1843 = vld [vmem:[%s15] sm:$0x1]
        %v1844 = vsel %vm883, %v1841, 0.0
        %1845 = vadd.xlane.f32.xlu0 %v1844
        %v1846 = vpop.xlane.xlu0 %1845
        %v1847 = vmul.f32 %v1846, %v1636
        %v1848 = vsub.f32 %v1841, %v1847
        %v1849 = vmul.f32 %v1848, %v1848
        %v1850 = vsel %vm883, %v1849, 0.0
        %1851 = vadd.xlane.f32.xlu0 %v1850
        %v1852 = vpop.xlane.xlu0 %1851
        %v1853 = vmul.f32 %v1852, %v1636
        %v1854 = vadd.f32 %v1853, 1e-05
        %v1855 = vrsqrt.pop %v1854
        %v1856 = vmul.f32 %v1848, %v1855
        %v1858 = vlaneseq
        %v1859 = vshrl.u32 %v1858, 7
        %v1860 = vsub.s32 0, %v1859
        %v1861 = vrot.slane %v1842, %v1860
        %v1863 = vmul.f32 %v1856, %v1861
        %v1865 = vlaneseq
        %v1866 = vshrl.u32 %v1865, 7
        %v1867 = vsub.s32 0, %v1866
        %v1868 = vrot.slane %v1843, %v1867
        %v1870 = vadd.f32 %v1863, %v1868
        %1871 = vst.msk [vmem:[%s647] sm:$0xff] %vm883, %v1870
        %s1872 = sand.u32 %s410, 1
        %s1873 = scalar_lea.sflag [#allocation6], %s1872
        %s1874 = sand.u32 %s410, 1
        %s1875 = smul.addr %s1874, 8
        %s1876 = scalar_lea.vmem [#allocation13], %s1875
        // Predicated region
        $region109: #{tpu_custom_call.1} parent=83 // pred_check
          %p1877 = pneg %p420
        $region110: #{tpu_custom_call.1} parent=83 // pred_check_branch
          %1879 = sbr.rel (%p1877) target = $region112
        $region111: #{tpu_custom_call.1} parent=83 // pred_region
          %s1881 = ssub.s32 128, 128
          %1882 = vsyncadd %s1873, %s1881
          %s1883 = smul.addr %s39, 2
          %s1884 = sadd.s32 %s40, %s1883
          %s1885 = smul.addr %s1884, 128
          %s1886 = scalar_lea.hbm %s16, %s1885
          %s1888 = sshll.u32 %s1876, 4
          %s1889 = int_to_ptr.vmem [resolvable:$true] %s1888
          %1891 = dma.vmem_to_hbm [thread:$0]  %s1889, 128, %s1886, %s1873
        $region112: #{tpu_custom_call.1} parent=83 // pred_fallthru
          _
      $region84: #{tpu_custom_call.1} parent=5 // pred_fallthru
        _
      %p1892 = scmp.le.s32.totalorder 2, %s30
      // Predicated region
      $region113: #{tpu_custom_call.1} parent=5 // pred_check
        %p1893 = pneg %p1892
      $region114: #{tpu_custom_call.1} parent=5 // pred_check_branch
        %1895 = sbr.rel (%p1893) target = $region116
      $region115: #{tpu_custom_call.1} parent=5 // pred_region
        %s1896 = ssub.s32 %s30, 2
        // Predicated region
        $region117: #{tpu_custom_call.1} parent=115 // pred_check
          %p1897 = pneg %p426
        $region118: #{tpu_custom_call.1} parent=115 // pred_check_branch
          %1899 = sbr.rel (%p1897) target = $region120
        $region119: #{tpu_custom_call.1} parent=115 // pred_region
          %s1900 = sand.u32 %s411, 1
          %s1901 = scalar_lea.sflag [#allocation6], %s1900
          %s1902 = sand.u32 %s411, 1
          %s1903 = smul.addr %s1902, 8
          %s1904 = scalar_lea.vmem [#allocation13], %s1903
          %1905 = dma.done %s1901, 128
        $region120: #{tpu_custom_call.1} parent=115 // pred_fallthru
          _
      $region116: #{tpu_custom_call.1} parent=5 // pred_fallthru
        _
    $region6: #{tpu_custom_call.1} parent=1 // loop_footer
      %s34 = sadd.s32 1, %s30
    $region7: #{tpu_custom_call.1} parent=1 // loop_footer_branch
      %29 = sbr.rel target = $region3
    $region8: #{tpu_custom_call.1} parent=1 // loop_exit
      _
    %1906 = vsyncpa [#allocation5], 1
    %s1907 = scalar_lea.sflag [#allocation5], 1
    %1908 = vsyncpa %s1907, 1
    %1909 = vsyncpa [#allocation8], 1
    %1910 = vsyncpa [#allocation11], 1
    %1911 = vsyncpa [#allocation6], 1
    %s1912 = scalar_lea.sflag [#allocation6], 1
    %1913 = vsyncpa %s1912, 1

</llo_original>
